<compile_context>
chip_gen: v7x
topology: tpu7x:2x2x1
jax: 0.10.0
libtpu: 0.0.40
codegen_flags: <defaults>
</compile_context>

<pallas_src>
import functools

import jax
import jax.numpy as jnp
import numpy as np
from jax.experimental import pallas as pl
from jax.experimental.pallas import tpu as pltpu

C_IN, C_OUT, K = 8, 8, 3
STRIDE, PAD, OUT_PAD, DIL, GROUPS = 1, 1, 2, 2, 2
CG_IN = C_IN // GROUPS     # 4
CG_OUT = C_OUT // GROUPS   # 4
NTAPS = CG_IN * K * K      # 36
NEG_SLOPE = 0.294378


def _group_parallel_grid():
    # v7x has 2 TensorCores/chip -> split the independent group axis across them.
    # On single-TC v5e/v6e a 2-step grid only adds per-step overhead, so keep a
    # single fused step there (per perf review).
    try:
        kind = jax.devices()[0].device_kind.lower()
    except Exception:
        return False
    return ("v7" in kind) or ("7x" in kind)


def _convt_leaky_kernel(xc_ref, wl_ref, bl_ref, o_ref, *, g_blk):
    # xc_ref: (g_blk, CG_IN, K, Hp, Lc)  zero-padded input, pre-shifted along W
    #                                    by kw*DIL; compact lane axis Lc = N*Wo
    #                                    (no out-channel replication in HBM).
    # wl_ref: (g_blk, NTAPS, L)          spatially-flipped weights broadcast along
    #                                    the lane axis L = CG_OUT*N*Wo, co-major.
    # bl_ref: (g_blk, 1, L)              bias broadcast along the lane axis.
    # o_ref : (g_blk, Ho, L)
    Hp = xc_ref.shape[3]
    Ho = o_ref.shape[1]
    L = o_ref.shape[2]

    for g in range(g_blk):                                   # fully unrolled
        # whole weight slab for this group, sliced in-register per tap
        wslab = wl_ref[g, :, :]                              # (NTAPS, L)
        acc = jnp.broadcast_to(bl_ref[g, :, :], (Ho, L))     # bias-initialized
        for ci in range(CG_IN):
            for kw in range(K):
                # one slab load per (ci, kw); kh patches become value slices
                slab = xc_ref[g, ci, kw, :, :]               # (Hp, Lc)
                # replicate over the CG_OUT lane segments -> lane = (co, n, ow)
                slab = jnp.concatenate([slab] * CG_OUT, axis=-1)   # (Hp, L)
                for kh in range(K):
                    patch = slab[kh * DIL: kh * DIL + Ho, :]        # (Ho, L)
                    t = (ci * K + kh) * K + kw
                    wv = wslab[t:t + 1, :]                          # (1, L)
                    acc = acc + wv * patch
        # t1 > 0 ? t1 : t1 * 0.294378
        o_ref[g, :, :] = jnp.where(acc > 0, acc, acc * NEG_SLOPE).astype(o_ref.dtype)


def precompute_lane_params(weight, bias, N, Wo):
    """Lane-broadcast weight/bias tensors; depend only on (weight, bias) so they
    are built once and reused across calls (hoisted out of the per-call path)."""
    Lnw = N * Wo
    L = CG_OUT * Lnw
    # spatially flipped weights, lane axis ordered (co, n, ow)
    w_flip = weight[:, :, ::-1, ::-1].astype(jnp.float32)            # (C_IN, CG_OUT, K, K)
    wg = w_flip.reshape(GROUPS, CG_IN, CG_OUT, K, K)
    wl = jnp.transpose(wg, (0, 1, 3, 4, 2))                          # (G, ci, kh, kw, co)
    wl = jnp.broadcast_to(wl[..., None], (GROUPS, CG_IN, K, K, CG_OUT, Lnw))
    wlane = wl.reshape(GROUPS, NTAPS, L)

    bg = bias.astype(jnp.float32).reshape(GROUPS, CG_OUT)
    blane = jnp.broadcast_to(bg[:, :, None], (GROUPS, CG_OUT, Lnw)).reshape(GROUPS, 1, L)
    return wlane, blane


@jax.jit
def conv_transpose_leaky(x, wlane, blane):
    """x: (N, C_IN, H, W) f32; wlane: (G, 36, L); blane: (G, 1, L)."""
    N, C, H, W = x.shape
    assert C == C_IN
    Ho = (H - 1) * STRIDE - 2 * PAD + DIL * (K - 1) + OUT_PAD + 1
    Wo = (W - 1) * STRIDE - 2 * PAD + DIL * (K - 1) + OUT_PAD + 1
    pad_lo = DIL * (K - 1) - PAD                    # 3
    pad_hi = pad_lo + OUT_PAD                       # 5
    Hp = H + pad_lo + pad_hi                        # kh*DIL + Ho <= Hp
    Lc = N * Wo                                     # compact input lane axis
    L = CG_OUT * Lc                                 # output lane axis (128 at N=2, W=12)
    assert wlane.shape == (GROUPS, NTAPS, L)
    assert blane.shape == (GROUPS, 1, L)

    # ---- compact layout plumbing (one fused XLA op): pad + per-kw W-shift only ----
    xp = jnp.pad(x.astype(jnp.float32),
                 ((0, 0), (0, 0), (pad_lo, pad_hi), (pad_lo, pad_hi)))
    xs = jnp.stack([xp[:, :, :, kw * DIL: kw * DIL + Wo] for kw in range(K)], axis=0)
    xs = xs.reshape(K, N, GROUPS, CG_IN, Hp, Wo)
    # -> (GROUPS, CG_IN, kw, Hp, lane=(n, ow))
    xc = jnp.transpose(xs, (2, 3, 0, 4, 1, 5)).reshape(GROUPS, CG_IN, K, Hp, Lc)

    if _group_parallel_grid():
        grid, g_blk, sem = (GROUPS,), 1, ("parallel",)       # v7x: one group per TC
    else:
        grid, g_blk, sem = (1,), GROUPS, ("arbitrary",)      # v5e/v6e: single step

    out = pl.pallas_call(
        functools.partial(_convt_leaky_kernel, g_blk=g_blk),
        out_shape=jax.ShapeDtypeStruct((GROUPS, Ho, L), jnp.float32),
        grid=grid,
        in_specs=[
            pl.BlockSpec((g_blk, CG_IN, K, Hp, Lc), lambda g: (g, 0, 0, 0, 0)),
            pl.BlockSpec((g_blk, NTAPS, L), lambda g: (g, 0, 0)),
            pl.BlockSpec((g_blk, 1, L), lambda g: (g, 0, 0)),
        ],
        out_specs=pl.BlockSpec((g_blk, Ho, L), lambda g: (g, 0, 0)),
        compiler_params=pltpu.CompilerParams(dimension_semantics=sem),
    )(xc, wlane, blane)

    # unpack lanes (co, n, ow) back to NCHW
    out = out.reshape(GROUPS, Ho, CG_OUT, N, Wo)
    out = jnp.transpose(out, (3, 0, 2, 1, 4)).reshape(N, C_OUT, Ho, Wo)
    return out.astype(x.dtype)


def _reference(x, weight, bias):
    """Pure-JAX reference via lax.conv_general_dilated (same math, XLA codepath)."""
    pad_lo = DIL * (K - 1) - PAD
    pad_hi = pad_lo + OUT_PAD
    w_flip = weight[:, :, ::-1, ::-1].reshape(GROUPS, CG_IN, CG_OUT, K, K)
    w_oihw = jnp.transpose(w_flip, (0, 2, 1, 3, 4)).reshape(C_OUT, CG_IN, K, K)
    t1 = jax.lax.conv_general_dilated(
        x, w_oihw, window_strides=(1, 1),
        padding=((pad_lo, pad_hi), (pad_lo, pad_hi)),
        rhs_dilation=(DIL, DIL),
        dimension_numbers=("NCHW", "OIHW", "NCHW"),
        feature_group_count=GROUPS,
    ) + bias[None, :, None, None]
    return jnp.where(t1 > 0, t1, t1 * NEG_SLOPE)


if __name__ == "__main__":
    key = jax.random.PRNGKey(0)
    kx, kwt, kb = jax.random.split(key, 3)

    N, H, W = 2, 12, 12                      # small shapes consistent with the module
    x3 = jax.random.normal(kx, (N, C_IN, H, W), dtype=jnp.float32)
    # ConvTranspose2d weight layout: (in_channels, out_channels // groups, kH, kW)
    weight = 0.1 * jax.random.normal(kwt, (C_IN, CG_OUT, K, K), dtype=jnp.float32)
    bias = 0.1 * jax.random.normal(kb, (C_OUT,), dtype=jnp.float32)

    Ho = (H - 1) * STRIDE - 2 * PAD + DIL * (K - 1) + OUT_PAD + 1
    Wo = (W - 1) * STRIDE - 2 * PAD + DIL * (K - 1) + OUT_PAD + 1

    # hoisted: depends only on weight/bias, built once
    wlane, blane = precompute_lane_params(weight, bias, N, Wo)

    out = jax.block_until_ready(conv_transpose_leaky(x3, wlane, blane))
    ref = jax.block_until_ready(_reference(x3, weight, bias))

    assert out.shape == (N, C_OUT, Ho, Wo), out.shape
    np.testing.assert_allclose(np.asarray(out), np.asarray(ref), rtol=1e-4, atol=1e-4)
    print("KERNEL_OK")
</pallas_src>

<mosaic_0001>
module attributes {stable_mosaic.version = 11 : i64} {
  func.func @_convt_leaky_kernel(%arg0: i32, %arg1: memref<2x4x3x20x32xf32, #tpu.memory_space<vmem>>, %arg2: memref<2x36x128xf32, #tpu.memory_space<vmem>>, %arg3: memref<2x1x128xf32, #tpu.memory_space<vmem>>, %arg4: memref<2x16x128xf32, #tpu.memory_space<vmem>>) attributes {dimension_semantics = [#tpu.dimension_semantics<arbitrary>], iteration_bounds = array<i64: 1>, scalar_prefetch = 0 : i64, scratch_operands = 0 : i64, tpu.core_type = #tpu.core_type<tc>, window_params = [{transform_indices = @transform_0, window_bounds = array<i64: 2, 4, 3, 20, 32>}, {transform_indices = @transform_1, window_bounds = array<i64: 2, 36, 128>}, {transform_indices = @transform_2, window_bounds = array<i64: 2, 1, 128>}, {transform_indices = @transform_3, window_bounds = array<i64: 2, 16, 128>}]} {
    %c0 = arith.constant 0 : index
    %c0_0 = arith.constant 0 : index
    %c0_1 = arith.constant 0 : index
    %0 = vector.load %arg2[%c0, %c0_0, %c0_1] : memref<2x36x128xf32, #tpu.memory_space<vmem>>, vector<1x36x128xf32>
    %1 = vector.shape_cast %0 : vector<1x36x128xf32> to vector<36x128xf32>
    %c0_2 = arith.constant 0 : index
    %c0_3 = arith.constant 0 : index
    %c0_4 = arith.constant 0 : index
    %2 = vector.load %arg3[%c0_2, %c0_3, %c0_4] : memref<2x1x128xf32, #tpu.memory_space<vmem>>, vector<1x1x128xf32>
    %3 = vector.shape_cast %2 : vector<1x1x128xf32> to vector<1x128xf32>
    %4 = vector.shape_cast %3 : vector<1x128xf32> to vector<1x128xf32>
    %5 = vector.broadcast %4 : vector<1x128xf32> to vector<16x128xf32>
    %c0_5 = arith.constant 0 : index
    %c0_6 = arith.constant 0 : index
    %c0_7 = arith.constant 0 : index
    %c0_8 = arith.constant 0 : index
    %c0_9 = arith.constant 0 : index
    %6 = vector.load %arg1[%c0_5, %c0_6, %c0_7, %c0_8, %c0_9] : memref<2x4x3x20x32xf32, #tpu.memory_space<vmem>>, vector<1x1x1x20x32xf32>
    %7 = vector.shape_cast %6 : vector<1x1x1x20x32xf32> to vector<20x32xf32>
    %8 = tpu.concatenate %7, %7, %7, %7 in 1 : vector<20x32xf32>, vector<20x32xf32>, vector<20x32xf32>, vector<20x32xf32> -> vector<20x128xf32>
    %9 = vector.extract_strided_slice %8 {offsets = [0, 0], sizes = [16, 128], strides = [1, 1]} : vector<20x128xf32> to vector<16x128xf32>
    %10 = vector.extract_strided_slice %1 {offsets = [0, 0], sizes = [1, 128], strides = [1, 1]} : vector<36x128xf32> to vector<1x128xf32>
    %11 = vector.broadcast %10 : vector<1x128xf32> to vector<16x128xf32>
    %12 = arith.mulf %11, %9 : vector<16x128xf32>
    %13 = arith.addf %5, %12 : vector<16x128xf32>
    %14 = vector.extract_strided_slice %8 {offsets = [2, 0], sizes = [16, 128], strides = [1, 1]} : vector<20x128xf32> to vector<16x128xf32>
    %15 = vector.extract_strided_slice %1 {offsets = [3, 0], sizes = [1, 128], strides = [1, 1]} : vector<36x128xf32> to vector<1x128xf32>
    %16 = vector.broadcast %15 : vector<1x128xf32> to vector<16x128xf32>
    %17 = arith.mulf %16, %14 : vector<16x128xf32>
    %18 = arith.addf %13, %17 : vector<16x128xf32>
    %19 = vector.extract_strided_slice %8 {offsets = [4, 0], sizes = [16, 128], strides = [1, 1]} : vector<20x128xf32> to vector<16x128xf32>
    %20 = vector.extract_strided_slice %1 {offsets = [6, 0], sizes = [1, 128], strides = [1, 1]} : vector<36x128xf32> to vector<1x128xf32>
    %21 = vector.broadcast %20 : vector<1x128xf32> to vector<16x128xf32>
    %22 = arith.mulf %21, %19 : vector<16x128xf32>
    %23 = arith.addf %18, %22 : vector<16x128xf32>
    %c0_10 = arith.constant 0 : index
    %c0_11 = arith.constant 0 : index
    %c1 = arith.constant 1 : index
    %c0_12 = arith.constant 0 : index
    %c0_13 = arith.constant 0 : index
    %24 = vector.load %arg1[%c0_10, %c0_11, %c1, %c0_12, %c0_13] : memref<2x4x3x20x32xf32, #tpu.memory_space<vmem>>, vector<1x1x1x20x32xf32>
    %25 = vector.shape_cast %24 : vector<1x1x1x20x32xf32> to vector<20x32xf32>
    %26 = tpu.concatenate %25, %25, %25, %25 in 1 : vector<20x32xf32>, vector<20x32xf32>, vector<20x32xf32>, vector<20x32xf32> -> vector<20x128xf32>
    %27 = vector.extract_strided_slice %26 {offsets = [0, 0], sizes = [16, 128], strides = [1, 1]} : vector<20x128xf32> to vector<16x128xf32>
    %28 = vector.extract_strided_slice %1 {offsets = [1, 0], sizes = [1, 128], strides = [1, 1]} : vector<36x128xf32> to vector<1x128xf32>
    %29 = vector.broadcast %28 : vector<1x128xf32> to vector<16x128xf32>
    %30 = arith.mulf %29, %27 : vector<16x128xf32>
    %31 = arith.addf %23, %30 : vector<16x128xf32>
    %32 = vector.extract_strided_slice %26 {offsets = [2, 0], sizes = [16, 128], strides = [1, 1]} : vector<20x128xf32> to vector<16x128xf32>
    %33 = vector.extract_strided_slice %1 {offsets = [4, 0], sizes = [1, 128], strides = [1, 1]} : vector<36x128xf32> to vector<1x128xf32>
    %34 = vector.broadcast %33 : vector<1x128xf32> to vector<16x128xf32>
    %35 = arith.mulf %34, %32 : vector<16x128xf32>
    %36 = arith.addf %31, %35 : vector<16x128xf32>
    %37 = vector.extract_strided_slice %26 {offsets = [4, 0], sizes = [16, 128], strides = [1, 1]} : vector<20x128xf32> to vector<16x128xf32>
    %38 = vector.extract_strided_slice %1 {offsets = [7, 0], sizes = [1, 128], strides = [1, 1]} : vector<36x128xf32> to vector<1x128xf32>
    %39 = vector.broadcast %38 : vector<1x128xf32> to vector<16x128xf32>
    %40 = arith.mulf %39, %37 : vector<16x128xf32>
    %41 = arith.addf %36, %40 : vector<16x128xf32>
    %c0_14 = arith.constant 0 : index
    %c0_15 = arith.constant 0 : index
    %c2 = arith.constant 2 : index
    %c0_16 = arith.constant 0 : index
    %c0_17 = arith.constant 0 : index
    %42 = vector.load %arg1[%c0_14, %c0_15, %c2, %c0_16, %c0_17] : memref<2x4x3x20x32xf32, #tpu.memory_space<vmem>>, vector<1x1x1x20x32xf32>
    %43 = vector.shape_cast %42 : vector<1x1x1x20x32xf32> to vector<20x32xf32>
    %44 = tpu.concatenate %43, %43, %43, %43 in 1 : vector<20x32xf32>, vector<20x32xf32>, vector<20x32xf32>, vector<20x32xf32> -> vector<20x128xf32>
    %45 = vector.extract_strided_slice %44 {offsets = [0, 0], sizes = [16, 128], strides = [1, 1]} : vector<20x128xf32> to vector<16x128xf32>
    %46 = vector.extract_strided_slice %1 {offsets = [2, 0], sizes = [1, 128], strides = [1, 1]} : vector<36x128xf32> to vector<1x128xf32>
    %47 = vector.broadcast %46 : vector<1x128xf32> to vector<16x128xf32>
    %48 = arith.mulf %47, %45 : vector<16x128xf32>
    %49 = arith.addf %41, %48 : vector<16x128xf32>
    %50 = vector.extract_strided_slice %44 {offsets = [2, 0], sizes = [16, 128], strides = [1, 1]} : vector<20x128xf32> to vector<16x128xf32>
    %51 = vector.extract_strided_slice %1 {offsets = [5, 0], sizes = [1, 128], strides = [1, 1]} : vector<36x128xf32> to vector<1x128xf32>
    %52 = vector.broadcast %51 : vector<1x128xf32> to vector<16x128xf32>
    %53 = arith.mulf %52, %50 : vector<16x128xf32>
    %54 = arith.addf %49, %53 : vector<16x128xf32>
    %55 = vector.extract_strided_slice %44 {offsets = [4, 0], sizes = [16, 128], strides = [1, 1]} : vector<20x128xf32> to vector<16x128xf32>
    %56 = vector.extract_strided_slice %1 {offsets = [8, 0], sizes = [1, 128], strides = [1, 1]} : vector<36x128xf32> to vector<1x128xf32>
    %57 = vector.broadcast %56 : vector<1x128xf32> to vector<16x128xf32>
    %58 = arith.mulf %57, %55 : vector<16x128xf32>
    %59 = arith.addf %54, %58 : vector<16x128xf32>
    %c0_18 = arith.constant 0 : index
    %c1_19 = arith.constant 1 : index
    %c0_20 = arith.constant 0 : index
    %c0_21 = arith.constant 0 : index
    %c0_22 = arith.constant 0 : index
    %60 = vector.load %arg1[%c0_18, %c1_19, %c0_20, %c0_21, %c0_22] : memref<2x4x3x20x32xf32, #tpu.memory_space<vmem>>, vector<1x1x1x20x32xf32>
    %61 = vector.shape_cast %60 : vector<1x1x1x20x32xf32> to vector<20x32xf32>
    %62 = tpu.concatenate %61, %61, %61, %61 in 1 : vector<20x32xf32>, vector<20x32xf32>, vector<20x32xf32>, vector<20x32xf32> -> vector<20x128xf32>
    %63 = vector.extract_strided_slice %62 {offsets = [0, 0], sizes = [16, 128], strides = [1, 1]} : vector<20x128xf32> to vector<16x128xf32>
    %64 = vector.extract_strided_slice %1 {offsets = [9, 0], sizes = [1, 128], strides = [1, 1]} : vector<36x128xf32> to vector<1x128xf32>
    %65 = vector.broadcast %64 : vector<1x128xf32> to vector<16x128xf32>
    %66 = arith.mulf %65, %63 : vector<16x128xf32>
    %67 = arith.addf %59, %66 : vector<16x128xf32>
    %68 = vector.extract_strided_slice %62 {offsets = [2, 0], sizes = [16, 128], strides = [1, 1]} : vector<20x128xf32> to vector<16x128xf32>
    %69 = vector.extract_strided_slice %1 {offsets = [12, 0], sizes = [1, 128], strides = [1, 1]} : vector<36x128xf32> to vector<1x128xf32>
    %70 = vector.broadcast %69 : vector<1x128xf32> to vector<16x128xf32>
    %71 = arith.mulf %70, %68 : vector<16x128xf32>
    %72 = arith.addf %67, %71 : vector<16x128xf32>
    %73 = vector.extract_strided_slice %62 {offsets = [4, 0], sizes = [16, 128], strides = [1, 1]} : vector<20x128xf32> to vector<16x128xf32>
    %74 = vector.extract_strided_slice %1 {offsets = [15, 0], sizes = [1, 128], strides = [1, 1]} : vector<36x128xf32> to vector<1x128xf32>
    %75 = vector.broadcast %74 : vector<1x128xf32> to vector<16x128xf32>
    %76 = arith.mulf %75, %73 : vector<16x128xf32>
    %77 = arith.addf %72, %76 : vector<16x128xf32>
    %c0_23 = arith.constant 0 : index
    %c1_24 = arith.constant 1 : index
    %c1_25 = arith.constant 1 : index
    %c0_26 = arith.constant 0 : index
    %c0_27 = arith.constant 0 : index
    %78 = vector.load %arg1[%c0_23, %c1_24, %c1_25, %c0_26, %c0_27] : memref<2x4x3x20x32xf32, #tpu.memory_space<vmem>>, vector<1x1x1x20x32xf32>
    %79 = vector.shape_cast %78 : vector<1x1x1x20x32xf32> to vector<20x32xf32>
    %80 = tpu.concatenate %79, %79, %79, %79 in 1 : vector<20x32xf32>, vector<20x32xf32>, vector<20x32xf32>, vector<20x32xf32> -> vector<20x128xf32>
    %81 = vector.extract_strided_slice %80 {offsets = [0, 0], sizes = [16, 128], strides = [1, 1]} : vector<20x128xf32> to vector<16x128xf32>
    %82 = vector.extract_strided_slice %1 {offsets = [10, 0], sizes = [1, 128], strides = [1, 1]} : vector<36x128xf32> to vector<1x128xf32>
    %83 = vector.broadcast %82 : vector<1x128xf32> to vector<16x128xf32>
    %84 = arith.mulf %83, %81 : vector<16x128xf32>
    %85 = arith.addf %77, %84 : vector<16x128xf32>
    %86 = vector.extract_strided_slice %80 {offsets = [2, 0], sizes = [16, 128], strides = [1, 1]} : vector<20x128xf32> to vector<16x128xf32>
    %87 = vector.extract_strided_slice %1 {offsets = [13, 0], sizes = [1, 128], strides = [1, 1]} : vector<36x128xf32> to vector<1x128xf32>
    %88 = vector.broadcast %87 : vector<1x128xf32> to vector<16x128xf32>
    %89 = arith.mulf %88, %86 : vector<16x128xf32>
    %90 = arith.addf %85, %89 : vector<16x128xf32>
    %91 = vector.extract_strided_slice %80 {offsets = [4, 0], sizes = [16, 128], strides = [1, 1]} : vector<20x128xf32> to vector<16x128xf32>
    %92 = vector.extract_strided_slice %1 {offsets = [16, 0], sizes = [1, 128], strides = [1, 1]} : vector<36x128xf32> to vector<1x128xf32>
    %93 = vector.broadcast %92 : vector<1x128xf32> to vector<16x128xf32>
    %94 = arith.mulf %93, %91 : vector<16x128xf32>
    %95 = arith.addf %90, %94 : vector<16x128xf32>
    %c0_28 = arith.constant 0 : index
    %c1_29 = arith.constant 1 : index
    %c2_30 = arith.constant 2 : index
    %c0_31 = arith.constant 0 : index
    %c0_32 = arith.constant 0 : index
    %96 = vector.load %arg1[%c0_28, %c1_29, %c2_30, %c0_31, %c0_32] : memref<2x4x3x20x32xf32, #tpu.memory_space<vmem>>, vector<1x1x1x20x32xf32>
    %97 = vector.shape_cast %96 : vector<1x1x1x20x32xf32> to vector<20x32xf32>
    %98 = tpu.concatenate %97, %97, %97, %97 in 1 : vector<20x32xf32>, vector<20x32xf32>, vector<20x32xf32>, vector<20x32xf32> -> vector<20x128xf32>
    %99 = vector.extract_strided_slice %98 {offsets = [0, 0], sizes = [16, 128], strides = [1, 1]} : vector<20x128xf32> to vector<16x128xf32>
    %100 = vector.extract_strided_slice %1 {offsets = [11, 0], sizes = [1, 128], strides = [1, 1]} : vector<36x128xf32> to vector<1x128xf32>
    %101 = vector.broadcast %100 : vector<1x128xf32> to vector<16x128xf32>
    %102 = arith.mulf %101, %99 : vector<16x128xf32>
    %103 = arith.addf %95, %102 : vector<16x128xf32>
    %104 = vector.extract_strided_slice %98 {offsets = [2, 0], sizes = [16, 128], strides = [1, 1]} : vector<20x128xf32> to vector<16x128xf32>
    %105 = vector.extract_strided_slice %1 {offsets = [14, 0], sizes = [1, 128], strides = [1, 1]} : vector<36x128xf32> to vector<1x128xf32>
    %106 = vector.broadcast %105 : vector<1x128xf32> to vector<16x128xf32>
    %107 = arith.mulf %106, %104 : vector<16x128xf32>
    %108 = arith.addf %103, %107 : vector<16x128xf32>
    %109 = vector.extract_strided_slice %98 {offsets = [4, 0], sizes = [16, 128], strides = [1, 1]} : vector<20x128xf32> to vector<16x128xf32>
    %110 = vector.extract_strided_slice %1 {offsets = [17, 0], sizes = [1, 128], strides = [1, 1]} : vector<36x128xf32> to vector<1x128xf32>
    %111 = vector.broadcast %110 : vector<1x128xf32> to vector<16x128xf32>
    %112 = arith.mulf %111, %109 : vector<16x128xf32>
    %113 = arith.addf %108, %112 : vector<16x128xf32>
    %c0_33 = arith.constant 0 : index
    %c2_34 = arith.constant 2 : index
    %c0_35 = arith.constant 0 : index
    %c0_36 = arith.constant 0 : index
    %c0_37 = arith.constant 0 : index
    %114 = vector.load %arg1[%c0_33, %c2_34, %c0_35, %c0_36, %c0_37] : memref<2x4x3x20x32xf32, #tpu.memory_space<vmem>>, vector<1x1x1x20x32xf32>
    %115 = vector.shape_cast %114 : vector<1x1x1x20x32xf32> to vector<20x32xf32>
    %116 = tpu.concatenate %115, %115, %115, %115 in 1 : vector<20x32xf32>, vector<20x32xf32>, vector<20x32xf32>, vector<20x32xf32> -> vector<20x128xf32>
    %117 = vector.extract_strided_slice %116 {offsets = [0, 0], sizes = [16, 128], strides = [1, 1]} : vector<20x128xf32> to vector<16x128xf32>
    %118 = vector.extract_strided_slice %1 {offsets = [18, 0], sizes = [1, 128], strides = [1, 1]} : vector<36x128xf32> to vector<1x128xf32>
    %119 = vector.broadcast %118 : vector<1x128xf32> to vector<16x128xf32>
    %120 = arith.mulf %119, %117 : vector<16x128xf32>
    %121 = arith.addf %113, %120 : vector<16x128xf32>
    %122 = vector.extract_strided_slice %116 {offsets = [2, 0], sizes = [16, 128], strides = [1, 1]} : vector<20x128xf32> to vector<16x128xf32>
    %123 = vector.extract_strided_slice %1 {offsets = [21, 0], sizes = [1, 128], strides = [1, 1]} : vector<36x128xf32> to vector<1x128xf32>
    %124 = vector.broadcast %123 : vector<1x128xf32> to vector<16x128xf32>
    %125 = arith.mulf %124, %122 : vector<16x128xf32>
    %126 = arith.addf %121, %125 : vector<16x128xf32>
    %127 = vector.extract_strided_slice %116 {offsets = [4, 0], sizes = [16, 128], strides = [1, 1]} : vector<20x128xf32> to vector<16x128xf32>
    %128 = vector.extract_strided_slice %1 {offsets = [24, 0], sizes = [1, 128], strides = [1, 1]} : vector<36x128xf32> to vector<1x128xf32>
    %129 = vector.broadcast %128 : vector<1x128xf32> to vector<16x128xf32>
    %130 = arith.mulf %129, %127 : vector<16x128xf32>
    %131 = arith.addf %126, %130 : vector<16x128xf32>
    %c0_38 = arith.constant 0 : index
    %c2_39 = arith.constant 2 : index
    %c1_40 = arith.constant 1 : index
    %c0_41 = arith.constant 0 : index
    %c0_42 = arith.constant 0 : index
    %132 = vector.load %arg1[%c0_38, %c2_39, %c1_40, %c0_41, %c0_42] : memref<2x4x3x20x32xf32, #tpu.memory_space<vmem>>, vector<1x1x1x20x32xf32>
    %133 = vector.shape_cast %132 : vector<1x1x1x20x32xf32> to vector<20x32xf32>
    %134 = tpu.concatenate %133, %133, %133, %133 in 1 : vector<20x32xf32>, vector<20x32xf32>, vector<20x32xf32>, vector<20x32xf32> -> vector<20x128xf32>
    %135 = vector.extract_strided_slice %134 {offsets = [0, 0], sizes = [16, 128], strides = [1, 1]} : vector<20x128xf32> to vector<16x128xf32>
    %136 = vector.extract_strided_slice %1 {offsets = [19, 0], sizes = [1, 128], strides = [1, 1]} : vector<36x128xf32> to vector<1x128xf32>
    %137 = vector.broadcast %136 : vector<1x128xf32> to vector<16x128xf32>
    %138 = arith.mulf %137, %135 : vector<16x128xf32>
    %139 = arith.addf %131, %138 : vector<16x128xf32>
    %140 = vector.extract_strided_slice %134 {offsets = [2, 0], sizes = [16, 128], strides = [1, 1]} : vector<20x128xf32> to vector<16x128xf32>
    %141 = vector.extract_strided_slice %1 {offsets = [22, 0], sizes = [1, 128], strides = [1, 1]} : vector<36x128xf32> to vector<1x128xf32>
    %142 = vector.broadcast %141 : vector<1x128xf32> to vector<16x128xf32>
    %143 = arith.mulf %142, %140 : vector<16x128xf32>
    %144 = arith.addf %139, %143 : vector<16x128xf32>
    %145 = vector.extract_strided_slice %134 {offsets = [4, 0], sizes = [16, 128], strides = [1, 1]} : vector<20x128xf32> to vector<16x128xf32>
    %146 = vector.extract_strided_slice %1 {offsets = [25, 0], sizes = [1, 128], strides = [1, 1]} : vector<36x128xf32> to vector<1x128xf32>
    %147 = vector.broadcast %146 : vector<1x128xf32> to vector<16x128xf32>
    %148 = arith.mulf %147, %145 : vector<16x128xf32>
    %149 = arith.addf %144, %148 : vector<16x128xf32>
    %c0_43 = arith.constant 0 : index
    %c2_44 = arith.constant 2 : index
    %c2_45 = arith.constant 2 : index
    %c0_46 = arith.constant 0 : index
    %c0_47 = arith.constant 0 : index
    %150 = vector.load %arg1[%c0_43, %c2_44, %c2_45, %c0_46, %c0_47] : memref<2x4x3x20x32xf32, #tpu.memory_space<vmem>>, vector<1x1x1x20x32xf32>
    %151 = vector.shape_cast %150 : vector<1x1x1x20x32xf32> to vector<20x32xf32>
    %152 = tpu.concatenate %151, %151, %151, %151 in 1 : vector<20x32xf32>, vector<20x32xf32>, vector<20x32xf32>, vector<20x32xf32> -> vector<20x128xf32>
    %153 = vector.extract_strided_slice %152 {offsets = [0, 0], sizes = [16, 128], strides = [1, 1]} : vector<20x128xf32> to vector<16x128xf32>
    %154 = vector.extract_strided_slice %1 {offsets = [20, 0], sizes = [1, 128], strides = [1, 1]} : vector<36x128xf32> to vector<1x128xf32>
    %155 = vector.broadcast %154 : vector<1x128xf32> to vector<16x128xf32>
    %156 = arith.mulf %155, %153 : vector<16x128xf32>
    %157 = arith.addf %149, %156 : vector<16x128xf32>
    %158 = vector.extract_strided_slice %152 {offsets = [2, 0], sizes = [16, 128], strides = [1, 1]} : vector<20x128xf32> to vector<16x128xf32>
    %159 = vector.extract_strided_slice %1 {offsets = [23, 0], sizes = [1, 128], strides = [1, 1]} : vector<36x128xf32> to vector<1x128xf32>
    %160 = vector.broadcast %159 : vector<1x128xf32> to vector<16x128xf32>
    %161 = arith.mulf %160, %158 : vector<16x128xf32>
    %162 = arith.addf %157, %161 : vector<16x128xf32>
    %163 = vector.extract_strided_slice %152 {offsets = [4, 0], sizes = [16, 128], strides = [1, 1]} : vector<20x128xf32> to vector<16x128xf32>
    %164 = vector.extract_strided_slice %1 {offsets = [26, 0], sizes = [1, 128], strides = [1, 1]} : vector<36x128xf32> to vector<1x128xf32>
    %165 = vector.broadcast %164 : vector<1x128xf32> to vector<16x128xf32>
    %166 = arith.mulf %165, %163 : vector<16x128xf32>
    %167 = arith.addf %162, %166 : vector<16x128xf32>
    %c0_48 = arith.constant 0 : index
    %c3 = arith.constant 3 : index
    %c0_49 = arith.constant 0 : index
    %c0_50 = arith.constant 0 : index
    %c0_51 = arith.constant 0 : index
    %168 = vector.load %arg1[%c0_48, %c3, %c0_49, %c0_50, %c0_51] : memref<2x4x3x20x32xf32, #tpu.memory_space<vmem>>, vector<1x1x1x20x32xf32>
    %169 = vector.shape_cast %168 : vector<1x1x1x20x32xf32> to vector<20x32xf32>
    %170 = tpu.concatenate %169, %169, %169, %169 in 1 : vector<20x32xf32>, vector<20x32xf32>, vector<20x32xf32>, vector<20x32xf32> -> vector<20x128xf32>
    %171 = vector.extract_strided_slice %170 {offsets = [0, 0], sizes = [16, 128], strides = [1, 1]} : vector<20x128xf32> to vector<16x128xf32>
    %172 = vector.extract_strided_slice %1 {offsets = [27, 0], sizes = [1, 128], strides = [1, 1]} : vector<36x128xf32> to vector<1x128xf32>
    %173 = vector.broadcast %172 : vector<1x128xf32> to vector<16x128xf32>
    %174 = arith.mulf %173, %171 : vector<16x128xf32>
    %175 = arith.addf %167, %174 : vector<16x128xf32>
    %176 = vector.extract_strided_slice %170 {offsets = [2, 0], sizes = [16, 128], strides = [1, 1]} : vector<20x128xf32> to vector<16x128xf32>
    %177 = vector.extract_strided_slice %1 {offsets = [30, 0], sizes = [1, 128], strides = [1, 1]} : vector<36x128xf32> to vector<1x128xf32>
    %178 = vector.broadcast %177 : vector<1x128xf32> to vector<16x128xf32>
    %179 = arith.mulf %178, %176 : vector<16x128xf32>
    %180 = arith.addf %175, %179 : vector<16x128xf32>
    %181 = vector.extract_strided_slice %170 {offsets = [4, 0], sizes = [16, 128], strides = [1, 1]} : vector<20x128xf32> to vector<16x128xf32>
    %182 = vector.extract_strided_slice %1 {offsets = [33, 0], sizes = [1, 128], strides = [1, 1]} : vector<36x128xf32> to vector<1x128xf32>
    %183 = vector.broadcast %182 : vector<1x128xf32> to vector<16x128xf32>
    %184 = arith.mulf %183, %181 : vector<16x128xf32>
    %185 = arith.addf %180, %184 : vector<16x128xf32>
    %c0_52 = arith.constant 0 : index
    %c3_53 = arith.constant 3 : index
    %c1_54 = arith.constant 1 : index
    %c0_55 = arith.constant 0 : index
    %c0_56 = arith.constant 0 : index
    %186 = vector.load %arg1[%c0_52, %c3_53, %c1_54, %c0_55, %c0_56] : memref<2x4x3x20x32xf32, #tpu.memory_space<vmem>>, vector<1x1x1x20x32xf32>
    %187 = vector.shape_cast %186 : vector<1x1x1x20x32xf32> to vector<20x32xf32>
    %188 = tpu.concatenate %187, %187, %187, %187 in 1 : vector<20x32xf32>, vector<20x32xf32>, vector<20x32xf32>, vector<20x32xf32> -> vector<20x128xf32>
    %189 = vector.extract_strided_slice %188 {offsets = [0, 0], sizes = [16, 128], strides = [1, 1]} : vector<20x128xf32> to vector<16x128xf32>
    %190 = vector.extract_strided_slice %1 {offsets = [28, 0], sizes = [1, 128], strides = [1, 1]} : vector<36x128xf32> to vector<1x128xf32>
    %191 = vector.broadcast %190 : vector<1x128xf32> to vector<16x128xf32>
    %192 = arith.mulf %191, %189 : vector<16x128xf32>
    %193 = arith.addf %185, %192 : vector<16x128xf32>
    %194 = vector.extract_strided_slice %188 {offsets = [2, 0], sizes = [16, 128], strides = [1, 1]} : vector<20x128xf32> to vector<16x128xf32>
    %195 = vector.extract_strided_slice %1 {offsets = [31, 0], sizes = [1, 128], strides = [1, 1]} : vector<36x128xf32> to vector<1x128xf32>
    %196 = vector.broadcast %195 : vector<1x128xf32> to vector<16x128xf32>
    %197 = arith.mulf %196, %194 : vector<16x128xf32>
    %198 = arith.addf %193, %197 : vector<16x128xf32>
    %199 = vector.extract_strided_slice %188 {offsets = [4, 0], sizes = [16, 128], strides = [1, 1]} : vector<20x128xf32> to vector<16x128xf32>
    %200 = vector.extract_strided_slice %1 {offsets = [34, 0], sizes = [1, 128], strides = [1, 1]} : vector<36x128xf32> to vector<1x128xf32>
    %201 = vector.broadcast %200 : vector<1x128xf32> to vector<16x128xf32>
    %202 = arith.mulf %201, %199 : vector<16x128xf32>
    %203 = arith.addf %198, %202 : vector<16x128xf32>
    %c0_57 = arith.constant 0 : index
    %c3_58 = arith.constant 3 : index
    %c2_59 = arith.constant 2 : index
    %c0_60 = arith.constant 0 : index
    %c0_61 = arith.constant 0 : index
    %204 = vector.load %arg1[%c0_57, %c3_58, %c2_59, %c0_60, %c0_61] : memref<2x4x3x20x32xf32, #tpu.memory_space<vmem>>, vector<1x1x1x20x32xf32>
    %205 = vector.shape_cast %204 : vector<1x1x1x20x32xf32> to vector<20x32xf32>
    %206 = tpu.concatenate %205, %205, %205, %205 in 1 : vector<20x32xf32>, vector<20x32xf32>, vector<20x32xf32>, vector<20x32xf32> -> vector<20x128xf32>
    %207 = vector.extract_strided_slice %206 {offsets = [0, 0], sizes = [16, 128], strides = [1, 1]} : vector<20x128xf32> to vector<16x128xf32>
    %208 = vector.extract_strided_slice %1 {offsets = [29, 0], sizes = [1, 128], strides = [1, 1]} : vector<36x128xf32> to vector<1x128xf32>
    %209 = vector.broadcast %208 : vector<1x128xf32> to vector<16x128xf32>
    %210 = arith.mulf %209, %207 : vector<16x128xf32>
    %211 = arith.addf %203, %210 : vector<16x128xf32>
    %212 = vector.extract_strided_slice %206 {offsets = [2, 0], sizes = [16, 128], strides = [1, 1]} : vector<20x128xf32> to vector<16x128xf32>
    %213 = vector.extract_strided_slice %1 {offsets = [32, 0], sizes = [1, 128], strides = [1, 1]} : vector<36x128xf32> to vector<1x128xf32>
    %214 = vector.broadcast %213 : vector<1x128xf32> to vector<16x128xf32>
    %215 = arith.mulf %214, %212 : vector<16x128xf32>
    %216 = arith.addf %211, %215 : vector<16x128xf32>
    %217 = vector.extract_strided_slice %206 {offsets = [4, 0], sizes = [16, 128], strides = [1, 1]} : vector<20x128xf32> to vector<16x128xf32>
    %218 = vector.extract_strided_slice %1 {offsets = [35, 0], sizes = [1, 128], strides = [1, 1]} : vector<36x128xf32> to vector<1x128xf32>
    %219 = vector.broadcast %218 : vector<1x128xf32> to vector<16x128xf32>
    %220 = arith.mulf %219, %217 : vector<16x128xf32>
    %221 = arith.addf %216, %220 : vector<16x128xf32>
    %cst = arith.constant 0.000000e+00 : f32
    %222 = vector.broadcast %cst : f32 to vector<16x128xf32>
    %223 = arith.cmpf ogt, %221, %222 : vector<16x128xf32>
    %cst_62 = arith.constant 2.943780e-01 : f32
    %224 = vector.broadcast %cst_62 : f32 to vector<16x128xf32>
    %225 = arith.mulf %221, %224 : vector<16x128xf32>
    %226 = arith.select %223, %221, %225 : vector<16x128xi1>, vector<16x128xf32>
    %c0_63 = arith.constant 0 : index
    %c0_64 = arith.constant 0 : index
    %c0_65 = arith.constant 0 : index
    %227 = vector.load %arg4[%c0_63, %c0_64, %c0_65] : memref<2x16x128xf32, #tpu.memory_space<vmem>>, vector<1x16x128xf32>
    %228 = vector.shape_cast %227 : vector<1x16x128xf32> to vector<16x128xf32>
    %229 = vector.shape_cast %226 : vector<16x128xf32> to vector<1x16x128xf32>
    tpu.vector_store %arg4[%c0_63, %c0_64, %c0_65], %229 {strides = array<i32>} : memref<2x16x128xf32, #tpu.memory_space<vmem>>, vector<1x16x128xf32>,
    %c1_66 = arith.constant 1 : index
    %c0_67 = arith.constant 0 : index
    %c0_68 = arith.constant 0 : index
    %230 = vector.load %arg2[%c1_66, %c0_67, %c0_68] : memref<2x36x128xf32, #tpu.memory_space<vmem>>, vector<1x36x128xf32>
    %231 = vector.shape_cast %230 : vector<1x36x128xf32> to vector<36x128xf32>
    %c1_69 = arith.constant 1 : index
    %c0_70 = arith.constant 0 : index
    %c0_71 = arith.constant 0 : index
    %232 = vector.load %arg3[%c1_69, %c0_70, %c0_71] : memref<2x1x128xf32, #tpu.memory_space<vmem>>, vector<1x1x128xf32>
    %233 = vector.shape_cast %232 : vector<1x1x128xf32> to vector<1x128xf32>
    %234 = vector.shape_cast %233 : vector<1x128xf32> to vector<1x128xf32>
    %235 = vector.broadcast %234 : vector<1x128xf32> to vector<16x128xf32>
    %c1_72 = arith.constant 1 : index
    %c0_73 = arith.constant 0 : index
    %c0_74 = arith.constant 0 : index
    %c0_75 = arith.constant 0 : index
    %c0_76 = arith.constant 0 : index
    %236 = vector.load %arg1[%c1_72, %c0_73, %c0_74, %c0_75, %c0_76] : memref<2x4x3x20x32xf32, #tpu.memory_space<vmem>>, vector<1x1x1x20x32xf32>
    %237 = vector.shape_cast %236 : vector<1x1x1x20x32xf32> to vector<20x32xf32>
    %238 = tpu.concatenate %237, %237, %237, %237 in 1 : vector<20x32xf32>, vector<20x32xf32>, vector<20x32xf32>, vector<20x32xf32> -> vector<20x128xf32>
    %239 = vector.extract_strided_slice %238 {offsets = [0, 0], sizes = [16, 128], strides = [1, 1]} : vector<20x128xf32> to vector<16x128xf32>
    %240 = vector.extract_strided_slice %231 {offsets = [0, 0], sizes = [1, 128], strides = [1, 1]} : vector<36x128xf32> to vector<1x128xf32>
    %241 = vector.broadcast %240 : vector<1x128xf32> to vector<16x128xf32>
    %242 = arith.mulf %241, %239 : vector<16x128xf32>
    %243 = arith.addf %235, %242 : vector<16x128xf32>
    %244 = vector.extract_strided_slice %238 {offsets = [2, 0], sizes = [16, 128], strides = [1, 1]} : vector<20x128xf32> to vector<16x128xf32>
    %245 = vector.extract_strided_slice %231 {offsets = [3, 0], sizes = [1, 128], strides = [1, 1]} : vector<36x128xf32> to vector<1x128xf32>
    %246 = vector.broadcast %245 : vector<1x128xf32> to vector<16x128xf32>
    %247 = arith.mulf %246, %244 : vector<16x128xf32>
    %248 = arith.addf %243, %247 : vector<16x128xf32>
    %249 = vector.extract_strided_slice %238 {offsets = [4, 0], sizes = [16, 128], strides = [1, 1]} : vector<20x128xf32> to vector<16x128xf32>
    %250 = vector.extract_strided_slice %231 {offsets = [6, 0], sizes = [1, 128], strides = [1, 1]} : vector<36x128xf32> to vector<1x128xf32>
    %251 = vector.broadcast %250 : vector<1x128xf32> to vector<16x128xf32>
    %252 = arith.mulf %251, %249 : vector<16x128xf32>
    %253 = arith.addf %248, %252 : vector<16x128xf32>
    %c1_77 = arith.constant 1 : index
    %c0_78 = arith.constant 0 : index
    %c1_79 = arith.constant 1 : index
    %c0_80 = arith.constant 0 : index
    %c0_81 = arith.constant 0 : index
    %254 = vector.load %arg1[%c1_77, %c0_78, %c1_79, %c0_80, %c0_81] : memref<2x4x3x20x32xf32, #tpu.memory_space<vmem>>, vector<1x1x1x20x32xf32>
    %255 = vector.shape_cast %254 : vector<1x1x1x20x32xf32> to vector<20x32xf32>
    %256 = tpu.concatenate %255, %255, %255, %255 in 1 : vector<20x32xf32>, vector<20x32xf32>, vector<20x32xf32>, vector<20x32xf32> -> vector<20x128xf32>
    %257 = vector.extract_strided_slice %256 {offsets = [0, 0], sizes = [16, 128], strides = [1, 1]} : vector<20x128xf32> to vector<16x128xf32>
    %258 = vector.extract_strided_slice %231 {offsets = [1, 0], sizes = [1, 128], strides = [1, 1]} : vector<36x128xf32> to vector<1x128xf32>
    %259 = vector.broadcast %258 : vector<1x128xf32> to vector<16x128xf32>
    %260 = arith.mulf %259, %257 : vector<16x128xf32>
    %261 = arith.addf %253, %260 : vector<16x128xf32>
    %262 = vector.extract_strided_slice %256 {offsets = [2, 0], sizes = [16, 128], strides = [1, 1]} : vector<20x128xf32> to vector<16x128xf32>
    %263 = vector.extract_strided_slice %231 {offsets = [4, 0], sizes = [1, 128], strides = [1, 1]} : vector<36x128xf32> to vector<1x128xf32>
    %264 = vector.broadcast %263 : vector<1x128xf32> to vector<16x128xf32>
    %265 = arith.mulf %264, %262 : vector<16x128xf32>
    %266 = arith.addf %261, %265 : vector<16x128xf32>
    %267 = vector.extract_strided_slice %256 {offsets = [4, 0], sizes = [16, 128], strides = [1, 1]} : vector<20x128xf32> to vector<16x128xf32>
    %268 = vector.extract_strided_slice %231 {offsets = [7, 0], sizes = [1, 128], strides = [1, 1]} : vector<36x128xf32> to vector<1x128xf32>
    %269 = vector.broadcast %268 : vector<1x128xf32> to vector<16x128xf32>
    %270 = arith.mulf %269, %267 : vector<16x128xf32>
    %271 = arith.addf %266, %270 : vector<16x128xf32>
    %c1_82 = arith.constant 1 : index
    %c0_83 = arith.constant 0 : index
    %c2_84 = arith.constant 2 : index
    %c0_85 = arith.constant 0 : index
    %c0_86 = arith.constant 0 : index
    %272 = vector.load %arg1[%c1_82, %c0_83, %c2_84, %c0_85, %c0_86] : memref<2x4x3x20x32xf32, #tpu.memory_space<vmem>>, vector<1x1x1x20x32xf32>
    %273 = vector.shape_cast %272 : vector<1x1x1x20x32xf32> to vector<20x32xf32>
    %274 = tpu.concatenate %273, %273, %273, %273 in 1 : vector<20x32xf32>, vector<20x32xf32>, vector<20x32xf32>, vector<20x32xf32> -> vector<20x128xf32>
    %275 = vector.extract_strided_slice %274 {offsets = [0, 0], sizes = [16, 128], strides = [1, 1]} : vector<20x128xf32> to vector<16x128xf32>
    %276 = vector.extract_strided_slice %231 {offsets = [2, 0], sizes = [1, 128], strides = [1, 1]} : vector<36x128xf32> to vector<1x128xf32>
    %277 = vector.broadcast %276 : vector<1x128xf32> to vector<16x128xf32>
    %278 = arith.mulf %277, %275 : vector<16x128xf32>
    %279 = arith.addf %271, %278 : vector<16x128xf32>
    %280 = vector.extract_strided_slice %274 {offsets = [2, 0], sizes = [16, 128], strides = [1, 1]} : vector<20x128xf32> to vector<16x128xf32>
    %281 = vector.extract_strided_slice %231 {offsets = [5, 0], sizes = [1, 128], strides = [1, 1]} : vector<36x128xf32> to vector<1x128xf32>
    %282 = vector.broadcast %281 : vector<1x128xf32> to vector<16x128xf32>
    %283 = arith.mulf %282, %280 : vector<16x128xf32>
    %284 = arith.addf %279, %283 : vector<16x128xf32>
    %285 = vector.extract_strided_slice %274 {offsets = [4, 0], sizes = [16, 128], strides = [1, 1]} : vector<20x128xf32> to vector<16x128xf32>
    %286 = vector.extract_strided_slice %231 {offsets = [8, 0], sizes = [1, 128], strides = [1, 1]} : vector<36x128xf32> to vector<1x128xf32>
    %287 = vector.broadcast %286 : vector<1x128xf32> to vector<16x128xf32>
    %288 = arith.mulf %287, %285 : vector<16x128xf32>
    %289 = arith.addf %284, %288 : vector<16x128xf32>
    %c1_87 = arith.constant 1 : index
    %c1_88 = arith.constant 1 : index
    %c0_89 = arith.constant 0 : index
    %c0_90 = arith.constant 0 : index
    %c0_91 = arith.constant 0 : index
    %290 = vector.load %arg1[%c1_87, %c1_88, %c0_89, %c0_90, %c0_91] : memref<2x4x3x20x32xf32, #tpu.memory_space<vmem>>, vector<1x1x1x20x32xf32>
    %291 = vector.shape_cast %290 : vector<1x1x1x20x32xf32> to vector<20x32xf32>
    %292 = tpu.concatenate %291, %291, %291, %291 in 1 : vector<20x32xf32>, vector<20x32xf32>, vector<20x32xf32>, vector<20x32xf32> -> vector<20x128xf32>
    %293 = vector.extract_strided_slice %292 {offsets = [0, 0], sizes = [16, 128], strides = [1, 1]} : vector<20x128xf32> to vector<16x128xf32>
    %294 = vector.extract_strided_slice %231 {offsets = [9, 0], sizes = [1, 128], strides = [1, 1]} : vector<36x128xf32> to vector<1x128xf32>
    %295 = vector.broadcast %294 : vector<1x128xf32> to vector<16x128xf32>
    %296 = arith.mulf %295, %293 : vector<16x128xf32>
    %297 = arith.addf %289, %296 : vector<16x128xf32>
    %298 = vector.extract_strided_slice %292 {offsets = [2, 0], sizes = [16, 128], strides = [1, 1]} : vector<20x128xf32> to vector<16x128xf32>
    %299 = vector.extract_strided_slice %231 {offsets = [12, 0], sizes = [1, 128], strides = [1, 1]} : vector<36x128xf32> to vector<1x128xf32>
    %300 = vector.broadcast %299 : vector<1x128xf32> to vector<16x128xf32>
    %301 = arith.mulf %300, %298 : vector<16x128xf32>
    %302 = arith.addf %297, %301 : vector<16x128xf32>
    %303 = vector.extract_strided_slice %292 {offsets = [4, 0], sizes = [16, 128], strides = [1, 1]} : vector<20x128xf32> to vector<16x128xf32>
    %304 = vector.extract_strided_slice %231 {offsets = [15, 0], sizes = [1, 128], strides = [1, 1]} : vector<36x128xf32> to vector<1x128xf32>
    %305 = vector.broadcast %304 : vector<1x128xf32> to vector<16x128xf32>
    %306 = arith.mulf %305, %303 : vector<16x128xf32>
    %307 = arith.addf %302, %306 : vector<16x128xf32>
    %c1_92 = arith.constant 1 : index
    %c1_93 = arith.constant 1 : index
    %c1_94 = arith.constant 1 : index
    %c0_95 = arith.constant 0 : index
    %c0_96 = arith.constant 0 : index
    %308 = vector.load %arg1[%c1_92, %c1_93, %c1_94, %c0_95, %c0_96] : memref<2x4x3x20x32xf32, #tpu.memory_space<vmem>>, vector<1x1x1x20x32xf32>
    %309 = vector.shape_cast %308 : vector<1x1x1x20x32xf32> to vector<20x32xf32>
    %310 = tpu.concatenate %309, %309, %309, %309 in 1 : vector<20x32xf32>, vector<20x32xf32>, vector<20x32xf32>, vector<20x32xf32> -> vector<20x128xf32>
    %311 = vector.extract_strided_slice %310 {offsets = [0, 0], sizes = [16, 128], strides = [1, 1]} : vector<20x128xf32> to vector<16x128xf32>
    %312 = vector.extract_strided_slice %231 {offsets = [10, 0], sizes = [1, 128], strides = [1, 1]} : vector<36x128xf32> to vector<1x128xf32>
    %313 = vector.broadcast %312 : vector<1x128xf32> to vector<16x128xf32>
    %314 = arith.mulf %313, %311 : vector<16x128xf32>
    %315 = arith.addf %307, %314 : vector<16x128xf32>
    %316 = vector.extract_strided_slice %310 {offsets = [2, 0], sizes = [16, 128], strides = [1, 1]} : vector<20x128xf32> to vector<16x128xf32>
    %317 = vector.extract_strided_slice %231 {offsets = [13, 0], sizes = [1, 128], strides = [1, 1]} : vector<36x128xf32> to vector<1x128xf32>
    %318 = vector.broadcast %317 : vector<1x128xf32> to vector<16x128xf32>
    %319 = arith.mulf %318, %316 : vector<16x128xf32>
    %320 = arith.addf %315, %319 : vector<16x128xf32>
    %321 = vector.extract_strided_slice %310 {offsets = [4, 0], sizes = [16, 128], strides = [1, 1]} : vector<20x128xf32> to vector<16x128xf32>
    %322 = vector.extract_strided_slice %231 {offsets = [16, 0], sizes = [1, 128], strides = [1, 1]} : vector<36x128xf32> to vector<1x128xf32>
    %323 = vector.broadcast %322 : vector<1x128xf32> to vector<16x128xf32>
    %324 = arith.mulf %323, %321 : vector<16x128xf32>
    %325 = arith.addf %320, %324 : vector<16x128xf32>
    %c1_97 = arith.constant 1 : index
    %c1_98 = arith.constant 1 : index
    %c2_99 = arith.constant 2 : index
    %c0_100 = arith.constant 0 : index
    %c0_101 = arith.constant 0 : index
    %326 = vector.load %arg1[%c1_97, %c1_98, %c2_99, %c0_100, %c0_101] : memref<2x4x3x20x32xf32, #tpu.memory_space<vmem>>, vector<1x1x1x20x32xf32>
    %327 = vector.shape_cast %326 : vector<1x1x1x20x32xf32> to vector<20x32xf32>
    %328 = tpu.concatenate %327, %327, %327, %327 in 1 : vector<20x32xf32>, vector<20x32xf32>, vector<20x32xf32>, vector<20x32xf32> -> vector<20x128xf32>
    %329 = vector.extract_strided_slice %328 {offsets = [0, 0], sizes = [16, 128], strides = [1, 1]} : vector<20x128xf32> to vector<16x128xf32>
    %330 = vector.extract_strided_slice %231 {offsets = [11, 0], sizes = [1, 128], strides = [1, 1]} : vector<36x128xf32> to vector<1x128xf32>
    %331 = vector.broadcast %330 : vector<1x128xf32> to vector<16x128xf32>
    %332 = arith.mulf %331, %329 : vector<16x128xf32>
    %333 = arith.addf %325, %332 : vector<16x128xf32>
    %334 = vector.extract_strided_slice %328 {offsets = [2, 0], sizes = [16, 128], strides = [1, 1]} : vector<20x128xf32> to vector<16x128xf32>
    %335 = vector.extract_strided_slice %231 {offsets = [14, 0], sizes = [1, 128], strides = [1, 1]} : vector<36x128xf32> to vector<1x128xf32>
    %336 = vector.broadcast %335 : vector<1x128xf32> to vector<16x128xf32>
    %337 = arith.mulf %336, %334 : vector<16x128xf32>
    %338 = arith.addf %333, %337 : vector<16x128xf32>
    %339 = vector.extract_strided_slice %328 {offsets = [4, 0], sizes = [16, 128], strides = [1, 1]} : vector<20x128xf32> to vector<16x128xf32>
    %340 = vector.extract_strided_slice %231 {offsets = [17, 0], sizes = [1, 128], strides = [1, 1]} : vector<36x128xf32> to vector<1x128xf32>
    %341 = vector.broadcast %340 : vector<1x128xf32> to vector<16x128xf32>
    %342 = arith.mulf %341, %339 : vector<16x128xf32>
    %343 = arith.addf %338, %342 : vector<16x128xf32>
    %c1_102 = arith.constant 1 : index
    %c2_103 = arith.constant 2 : index
    %c0_104 = arith.constant 0 : index
    %c0_105 = arith.constant 0 : index
    %c0_106 = arith.constant 0 : index
    %344 = vector.load %arg1[%c1_102, %c2_103, %c0_104, %c0_105, %c0_106] : memref<2x4x3x20x32xf32, #tpu.memory_space<vmem>>, vector<1x1x1x20x32xf32>
    %345 = vector.shape_cast %344 : vector<1x1x1x20x32xf32> to vector<20x32xf32>
    %346 = tpu.concatenate %345, %345, %345, %345 in 1 : vector<20x32xf32>, vector<20x32xf32>, vector<20x32xf32>, vector<20x32xf32> -> vector<20x128xf32>
    %347 = vector.extract_strided_slice %346 {offsets = [0, 0], sizes = [16, 128], strides = [1, 1]} : vector<20x128xf32> to vector<16x128xf32>
    %348 = vector.extract_strided_slice %231 {offsets = [18, 0], sizes = [1, 128], strides = [1, 1]} : vector<36x128xf32> to vector<1x128xf32>
    %349 = vector.broadcast %348 : vector<1x128xf32> to vector<16x128xf32>
    %350 = arith.mulf %349, %347 : vector<16x128xf32>
    %351 = arith.addf %343, %350 : vector<16x128xf32>
    %352 = vector.extract_strided_slice %346 {offsets = [2, 0], sizes = [16, 128], strides = [1, 1]} : vector<20x128xf32> to vector<16x128xf32>
    %353 = vector.extract_strided_slice %231 {offsets = [21, 0], sizes = [1, 128], strides = [1, 1]} : vector<36x128xf32> to vector<1x128xf32>
    %354 = vector.broadcast %353 : vector<1x128xf32> to vector<16x128xf32>
    %355 = arith.mulf %354, %352 : vector<16x128xf32>
    %356 = arith.addf %351, %355 : vector<16x128xf32>
    %357 = vector.extract_strided_slice %346 {offsets = [4, 0], sizes = [16, 128], strides = [1, 1]} : vector<20x128xf32> to vector<16x128xf32>
    %358 = vector.extract_strided_slice %231 {offsets = [24, 0], sizes = [1, 128], strides = [1, 1]} : vector<36x128xf32> to vector<1x128xf32>
    %359 = vector.broadcast %358 : vector<1x128xf32> to vector<16x128xf32>
    %360 = arith.mulf %359, %357 : vector<16x128xf32>
    %361 = arith.addf %356, %360 : vector<16x128xf32>
    %c1_107 = arith.constant 1 : index
    %c2_108 = arith.constant 2 : index
    %c1_109 = arith.constant 1 : index
    %c0_110 = arith.constant 0 : index
    %c0_111 = arith.constant 0 : index
    %362 = vector.load %arg1[%c1_107, %c2_108, %c1_109, %c0_110, %c0_111] : memref<2x4x3x20x32xf32, #tpu.memory_space<vmem>>, vector<1x1x1x20x32xf32>
    %363 = vector.shape_cast %362 : vector<1x1x1x20x32xf32> to vector<20x32xf32>
    %364 = tpu.concatenate %363, %363, %363, %363 in 1 : vector<20x32xf32>, vector<20x32xf32>, vector<20x32xf32>, vector<20x32xf32> -> vector<20x128xf32>
    %365 = vector.extract_strided_slice %364 {offsets = [0, 0], sizes = [16, 128], strides = [1, 1]} : vector<20x128xf32> to vector<16x128xf32>
    %366 = vector.extract_strided_slice %231 {offsets = [19, 0], sizes = [1, 128], strides = [1, 1]} : vector<36x128xf32> to vector<1x128xf32>
    %367 = vector.broadcast %366 : vector<1x128xf32> to vector<16x128xf32>
    %368 = arith.mulf %367, %365 : vector<16x128xf32>
    %369 = arith.addf %361, %368 : vector<16x128xf32>
    %370 = vector.extract_strided_slice %364 {offsets = [2, 0], sizes = [16, 128], strides = [1, 1]} : vector<20x128xf32> to vector<16x128xf32>
    %371 = vector.extract_strided_slice %231 {offsets = [22, 0], sizes = [1, 128], strides = [1, 1]} : vector<36x128xf32> to vector<1x128xf32>
    %372 = vector.broadcast %371 : vector<1x128xf32> to vector<16x128xf32>
    %373 = arith.mulf %372, %370 : vector<16x128xf32>
    %374 = arith.addf %369, %373 : vector<16x128xf32>
    %375 = vector.extract_strided_slice %364 {offsets = [4, 0], sizes = [16, 128], strides = [1, 1]} : vector<20x128xf32> to vector<16x128xf32>
    %376 = vector.extract_strided_slice %231 {offsets = [25, 0], sizes = [1, 128], strides = [1, 1]} : vector<36x128xf32> to vector<1x128xf32>
    %377 = vector.broadcast %376 : vector<1x128xf32> to vector<16x128xf32>
    %378 = arith.mulf %377, %375 : vector<16x128xf32>
    %379 = arith.addf %374, %378 : vector<16x128xf32>
    %c1_112 = arith.constant 1 : index
    %c2_113 = arith.constant 2 : index
    %c2_114 = arith.constant 2 : index
    %c0_115 = arith.constant 0 : index
    %c0_116 = arith.constant 0 : index
    %380 = vector.load %arg1[%c1_112, %c2_113, %c2_114, %c0_115, %c0_116] : memref<2x4x3x20x32xf32, #tpu.memory_space<vmem>>, vector<1x1x1x20x32xf32>
    %381 = vector.shape_cast %380 : vector<1x1x1x20x32xf32> to vector<20x32xf32>
    %382 = tpu.concatenate %381, %381, %381, %381 in 1 : vector<20x32xf32>, vector<20x32xf32>, vector<20x32xf32>, vector<20x32xf32> -> vector<20x128xf32>
    %383 = vector.extract_strided_slice %382 {offsets = [0, 0], sizes = [16, 128], strides = [1, 1]} : vector<20x128xf32> to vector<16x128xf32>
    %384 = vector.extract_strided_slice %231 {offsets = [20, 0], sizes = [1, 128], strides = [1, 1]} : vector<36x128xf32> to vector<1x128xf32>
    %385 = vector.broadcast %384 : vector<1x128xf32> to vector<16x128xf32>
    %386 = arith.mulf %385, %383 : vector<16x128xf32>
    %387 = arith.addf %379, %386 : vector<16x128xf32>
    %388 = vector.extract_strided_slice %382 {offsets = [2, 0], sizes = [16, 128], strides = [1, 1]} : vector<20x128xf32> to vector<16x128xf32>
    %389 = vector.extract_strided_slice %231 {offsets = [23, 0], sizes = [1, 128], strides = [1, 1]} : vector<36x128xf32> to vector<1x128xf32>
    %390 = vector.broadcast %389 : vector<1x128xf32> to vector<16x128xf32>
    %391 = arith.mulf %390, %388 : vector<16x128xf32>
    %392 = arith.addf %387, %391 : vector<16x128xf32>
    %393 = vector.extract_strided_slice %382 {offsets = [4, 0], sizes = [16, 128], strides = [1, 1]} : vector<20x128xf32> to vector<16x128xf32>
    %394 = vector.extract_strided_slice %231 {offsets = [26, 0], sizes = [1, 128], strides = [1, 1]} : vector<36x128xf32> to vector<1x128xf32>
    %395 = vector.broadcast %394 : vector<1x128xf32> to vector<16x128xf32>
    %396 = arith.mulf %395, %393 : vector<16x128xf32>
    %397 = arith.addf %392, %396 : vector<16x128xf32>
    %c1_117 = arith.constant 1 : index
    %c3_118 = arith.constant 3 : index
    %c0_119 = arith.constant 0 : index
    %c0_120 = arith.constant 0 : index
    %c0_121 = arith.constant 0 : index
    %398 = vector.load %arg1[%c1_117, %c3_118, %c0_119, %c0_120, %c0_121] : memref<2x4x3x20x32xf32, #tpu.memory_space<vmem>>, vector<1x1x1x20x32xf32>
    %399 = vector.shape_cast %398 : vector<1x1x1x20x32xf32> to vector<20x32xf32>
    %400 = tpu.concatenate %399, %399, %399, %399 in 1 : vector<20x32xf32>, vector<20x32xf32>, vector<20x32xf32>, vector<20x32xf32> -> vector<20x128xf32>
    %401 = vector.extract_strided_slice %400 {offsets = [0, 0], sizes = [16, 128], strides = [1, 1]} : vector<20x128xf32> to vector<16x128xf32>
    %402 = vector.extract_strided_slice %231 {offsets = [27, 0], sizes = [1, 128], strides = [1, 1]} : vector<36x128xf32> to vector<1x128xf32>
    %403 = vector.broadcast %402 : vector<1x128xf32> to vector<16x128xf32>
    %404 = arith.mulf %403, %401 : vector<16x128xf32>
    %405 = arith.addf %397, %404 : vector<16x128xf32>
    %406 = vector.extract_strided_slice %400 {offsets = [2, 0], sizes = [16, 128], strides = [1, 1]} : vector<20x128xf32> to vector<16x128xf32>
    %407 = vector.extract_strided_slice %231 {offsets = [30, 0], sizes = [1, 128], strides = [1, 1]} : vector<36x128xf32> to vector<1x128xf32>
    %408 = vector.broadcast %407 : vector<1x128xf32> to vector<16x128xf32>
    %409 = arith.mulf %408, %406 : vector<16x128xf32>
    %410 = arith.addf %405, %409 : vector<16x128xf32>
    %411 = vector.extract_strided_slice %400 {offsets = [4, 0], sizes = [16, 128], strides = [1, 1]} : vector<20x128xf32> to vector<16x128xf32>
    %412 = vector.extract_strided_slice %231 {offsets = [33, 0], sizes = [1, 128], strides = [1, 1]} : vector<36x128xf32> to vector<1x128xf32>
    %413 = vector.broadcast %412 : vector<1x128xf32> to vector<16x128xf32>
    %414 = arith.mulf %413, %411 : vector<16x128xf32>
    %415 = arith.addf %410, %414 : vector<16x128xf32>
    %c1_122 = arith.constant 1 : index
    %c3_123 = arith.constant 3 : index
    %c1_124 = arith.constant 1 : index
    %c0_125 = arith.constant 0 : index
    %c0_126 = arith.constant 0 : index
    %416 = vector.load %arg1[%c1_122, %c3_123, %c1_124, %c0_125, %c0_126] : memref<2x4x3x20x32xf32, #tpu.memory_space<vmem>>, vector<1x1x1x20x32xf32>
    %417 = vector.shape_cast %416 : vector<1x1x1x20x32xf32> to vector<20x32xf32>
    %418 = tpu.concatenate %417, %417, %417, %417 in 1 : vector<20x32xf32>, vector<20x32xf32>, vector<20x32xf32>, vector<20x32xf32> -> vector<20x128xf32>
    %419 = vector.extract_strided_slice %418 {offsets = [0, 0], sizes = [16, 128], strides = [1, 1]} : vector<20x128xf32> to vector<16x128xf32>
    %420 = vector.extract_strided_slice %231 {offsets = [28, 0], sizes = [1, 128], strides = [1, 1]} : vector<36x128xf32> to vector<1x128xf32>
    %421 = vector.broadcast %420 : vector<1x128xf32> to vector<16x128xf32>
    %422 = arith.mulf %421, %419 : vector<16x128xf32>
    %423 = arith.addf %415, %422 : vector<16x128xf32>
    %424 = vector.extract_strided_slice %418 {offsets = [2, 0], sizes = [16, 128], strides = [1, 1]} : vector<20x128xf32> to vector<16x128xf32>
    %425 = vector.extract_strided_slice %231 {offsets = [31, 0], sizes = [1, 128], strides = [1, 1]} : vector<36x128xf32> to vector<1x128xf32>
    %426 = vector.broadcast %425 : vector<1x128xf32> to vector<16x128xf32>
    %427 = arith.mulf %426, %424 : vector<16x128xf32>
    %428 = arith.addf %423, %427 : vector<16x128xf32>
    %429 = vector.extract_strided_slice %418 {offsets = [4, 0], sizes = [16, 128], strides = [1, 1]} : vector<20x128xf32> to vector<16x128xf32>
    %430 = vector.extract_strided_slice %231 {offsets = [34, 0], sizes = [1, 128], strides = [1, 1]} : vector<36x128xf32> to vector<1x128xf32>
    %431 = vector.broadcast %430 : vector<1x128xf32> to vector<16x128xf32>
    %432 = arith.mulf %431, %429 : vector<16x128xf32>
    %433 = arith.addf %428, %432 : vector<16x128xf32>
    %c1_127 = arith.constant 1 : index
    %c3_128 = arith.constant 3 : index
    %c2_129 = arith.constant 2 : index
    %c0_130 = arith.constant 0 : index
    %c0_131 = arith.constant 0 : index
    %434 = vector.load %arg1[%c1_127, %c3_128, %c2_129, %c0_130, %c0_131] : memref<2x4x3x20x32xf32, #tpu.memory_space<vmem>>, vector<1x1x1x20x32xf32>
    %435 = vector.shape_cast %434 : vector<1x1x1x20x32xf32> to vector<20x32xf32>
    %436 = tpu.concatenate %435, %435, %435, %435 in 1 : vector<20x32xf32>, vector<20x32xf32>, vector<20x32xf32>, vector<20x32xf32> -> vector<20x128xf32>
    %437 = vector.extract_strided_slice %436 {offsets = [0, 0], sizes = [16, 128], strides = [1, 1]} : vector<20x128xf32> to vector<16x128xf32>
    %438 = vector.extract_strided_slice %231 {offsets = [29, 0], sizes = [1, 128], strides = [1, 1]} : vector<36x128xf32> to vector<1x128xf32>
    %439 = vector.broadcast %438 : vector<1x128xf32> to vector<16x128xf32>
    %440 = arith.mulf %439, %437 : vector<16x128xf32>
    %441 = arith.addf %433, %440 : vector<16x128xf32>
    %442 = vector.extract_strided_slice %436 {offsets = [2, 0], sizes = [16, 128], strides = [1, 1]} : vector<20x128xf32> to vector<16x128xf32>
    %443 = vector.extract_strided_slice %231 {offsets = [32, 0], sizes = [1, 128], strides = [1, 1]} : vector<36x128xf32> to vector<1x128xf32>
    %444 = vector.broadcast %443 : vector<1x128xf32> to vector<16x128xf32>
    %445 = arith.mulf %444, %442 : vector<16x128xf32>
    %446 = arith.addf %441, %445 : vector<16x128xf32>
    %447 = vector.extract_strided_slice %436 {offsets = [4, 0], sizes = [16, 128], strides = [1, 1]} : vector<20x128xf32> to vector<16x128xf32>
    %448 = vector.extract_strided_slice %231 {offsets = [35, 0], sizes = [1, 128], strides = [1, 1]} : vector<36x128xf32> to vector<1x128xf32>
    %449 = vector.broadcast %448 : vector<1x128xf32> to vector<16x128xf32>
    %450 = arith.mulf %449, %447 : vector<16x128xf32>
    %451 = arith.addf %446, %450 : vector<16x128xf32>
    %cst_132 = arith.constant 0.000000e+00 : f32
    %452 = vector.broadcast %cst_132 : f32 to vector<16x128xf32>
    %453 = arith.cmpf ogt, %451, %452 : vector<16x128xf32>
    %cst_133 = arith.constant 2.943780e-01 : f32
    %454 = vector.broadcast %cst_133 : f32 to vector<16x128xf32>
    %455 = arith.mulf %451, %454 : vector<16x128xf32>
    %456 = arith.select %453, %451, %455 : vector<16x128xi1>, vector<16x128xf32>
    %c1_134 = arith.constant 1 : index
    %c0_135 = arith.constant 0 : index
    %c0_136 = arith.constant 0 : index
    %457 = vector.load %arg4[%c1_134, %c0_135, %c0_136] : memref<2x16x128xf32, #tpu.memory_space<vmem>>, vector<1x16x128xf32>
    %458 = vector.shape_cast %457 : vector<1x16x128xf32> to vector<16x128xf32>
    %459 = vector.shape_cast %456 : vector<16x128xf32> to vector<1x16x128xf32>
    tpu.vector_store %arg4[%c1_134, %c0_135, %c0_136], %459 {strides = array<i32>} : memref<2x16x128xf32, #tpu.memory_space<vmem>>, vector<1x16x128xf32>,
    return
  }
  func.func @transform_0(%arg0: i32) -> (i32, i32, i32, i32, i32) {
    %c0_i32 = arith.constant 0 : i32
    %c0_i32_0 = arith.constant 0 : i32
    %c0_i32_1 = arith.constant 0 : i32
    %c0_i32_2 = arith.constant 0 : i32
    %c0_i32_3 = arith.constant 0 : i32
    return %arg0, %c0_i32, %c0_i32_0, %c0_i32_1, %c0_i32_2 : i32, i32, i32, i32, i32
  }
  func.func @transform_1(%arg0: i32) -> (i32, i32, i32) {
    %c0_i32 = arith.constant 0 : i32
    %c0_i32_0 = arith.constant 0 : i32
    %c0_i32_1 = arith.constant 0 : i32
    return %arg0, %c0_i32, %c0_i32_0 : i32, i32, i32
  }
  func.func @transform_2(%arg0: i32) -> (i32, i32, i32) {
    %c0_i32 = arith.constant 0 : i32
    %c0_i32_0 = arith.constant 0 : i32
    %c0_i32_1 = arith.constant 0 : i32
    return %arg0, %c0_i32, %c0_i32_0 : i32, i32, i32
  }
  func.func @transform_3(%arg0: i32) -> (i32, i32, i32) {
    %c0_i32 = arith.constant 0 : i32
    %c0_i32_0 = arith.constant 0 : i32
    %c0_i32_1 = arith.constant 0 : i32
    return %arg0, %c0_i32, %c0_i32_0 : i32, i32, i32
  }
}

</mosaic_0001>

<llo_original>
// kernel: conv_transpose_leaky.1
$region0: #{conv_transpose_leaky.1}
  #allocation0 [shape = 'u32[]', space=smem, size = 0x4, offset = 0x4, fixed_abs, tag = 'smem constant byte address 0x4 - core index']
  #allocation1 [shape = 'u32[144,128]{1,0:T(1,128)}', space=vmem, size = 0x12000, scoped, tag = 'internal scratch']
  %s0 = inlined_call_operand.vmem [shape: f32[2,4,3,20,32], index: 0, kind: input, shape index: {}]
  %s1 = inlined_call_operand.vmem [shape: f32[2,36,128], index: 1, kind: input, shape index: {}]
  %s2 = inlined_call_operand.vmem [shape: f32[2,1,128], index: 2, kind: input, shape index: {}]
  %s3 = inlined_call_operand.vmem [shape: f32[2,16,128], index: 3, kind: output, shape index: {}]
  %s4 = sld [smem:[#allocation0]]
  $region22: #{conv_transpose_leaky.1} parent=0
    _
  %s6 = ssub.s32 1, %s4
  %s7 = scalar_select 0, %s6, %s4
  // Predicated region
  $region2: #{conv_transpose_leaky.1} parent=0 // pred_check
    _
  $region3: #{conv_transpose_leaky.1} parent=0 // pred_check_branch
    %9 = sbr.rel (0) target = $region5
  $region4: #{conv_transpose_leaky.1} parent=0 // pred_region
    _
  $region5: #{conv_transpose_leaky.1} parent=0 // pred_fallthru
    _
  // Predicated region
  $region6: #{conv_transpose_leaky.1} parent=0 // pred_check
    _
  $region7: #{conv_transpose_leaky.1} parent=0 // pred_check_branch
    %11 = sbr.rel (0) target = $region9
  $region8: #{conv_transpose_leaky.1} parent=0 // pred_region
    _
  $region9: #{conv_transpose_leaky.1} parent=0 // pred_fallthru
    _
  // Predicated region
  $region10: #{conv_transpose_leaky.1} parent=0 // pred_check
    _
  $region11: #{conv_transpose_leaky.1} parent=0 // pred_check_branch
    %13 = sbr.rel (0) target = $region13
  $region12: #{conv_transpose_leaky.1} parent=0 // pred_region
    _
  $region13: #{conv_transpose_leaky.1} parent=0 // pred_fallthru
    _
  %v14 = vld [vmem:[%s1] sm:$0xff]
  %v15 = vld [vmem:[%s1 + $0x8] sm:$0xff]
  %v16 = vld [vmem:[%s1 + $0x10] sm:$0xff]
  %v17 = vld [vmem:[%s1 + $0x18] sm:$0xff]
  %v18 = vld [vmem:[%s1 + $0x20] sm:$0xf]
  %v19 = vld [vmem:[%s2] sm:$0x1]
  %v21 = vlaneseq
  %v22 = vshrl.u32 %v21, 7
  %v23 = vsub.s32 0, %v22
  %v24 = vrot.slane %v19, %v23
  %v26 = vld [vmem:[%s0] sm:$0xff]
  %v27 = vld [vmem:[%s0 + $0x8] sm:$0xff]
  %v28 = vld [vmem:[%s0 + $0x10] sm:$0xf]
  %32 = vrot.lane.b32.xlu0 %v26, 32
  %v33 = vpop.permute.xlu0 %32
  %34 = vrot.lane.b32.xlu0 %v27, 32
  %v35 = vpop.permute.xlu0 %34
  %36 = vrot.lane.b32.xlu0 %v28, 32
  %v37 = vpop.permute.xlu0 %36
  %41 = vrot.lane.b32.xlu0 %v26, 64
  %v42 = vpop.permute.xlu0 %41
  %43 = vrot.lane.b32.xlu0 %v27, 64
  %v44 = vpop.permute.xlu0 %43
  %45 = vrot.lane.b32.xlu0 %v28, 64
  %v46 = vpop.permute.xlu0 %45
  %50 = vrot.lane.b32.xlu0 %v26, 96
  %v51 = vpop.permute.xlu0 %50
  %52 = vrot.lane.b32.xlu0 %v27, 96
  %v53 = vpop.permute.xlu0 %52
  %54 = vrot.lane.b32.xlu0 %v28, 96
  %v55 = vpop.permute.xlu0 %54
  %vm59 = vcmask 261120
  %v60 = vsel %vm59, %v26, %v33
  %v61 = vsel %vm59, %v27, %v35
  %v62 = vsel %vm59, %v28, %v37
  %vm63 = vcmask 523264
  %v64 = vsel %vm63, %v60, %v42
  %v65 = vsel %vm63, %v61, %v44
  %v66 = vsel %vm63, %v62, %v46
  %vm67 = vcmask 785408
  %v68 = vsel %vm67, %v64, %v51
  %v69 = vsel %vm67, %v65, %v53
  %v70 = vsel %vm67, %v66, %v55
  %v71 = vlaneseq
  %v72 = vshrl.u32 %v71, 7
  %v73 = vsub.s32 0, %v72
  %v74 = vrot.slane %v14, %v73
  %v75 = vmul.f32 %v74, %v68
  %v76 = vmul.f32 %v74, %v69
  %v77 = vadd.f32 %v24, %v75
  %v78 = vadd.f32 %v24, %v76
  %v79 = vlaneseq
  %v80 = vshrl.u32 %v79, 7
  %v81 = vsub.s32 3, %v80
  %v82 = vrot.slane %v14, %v81
  %v83 = vmul.f32 %v82, %v68
  %v84 = vmul.f32 %v82, %v69
  %v85 = vmul.f32 %v82, %v70
  %vm89 = vcmask 1045504
  %v90 = vrot.slane %v83, 2
  %v91 = vrot.slane %v84, 2
  %v92 = vsel %vm89, %v90, %v91
  %v93 = vrot.slane %v85, 2
  %v94 = vsel %vm89, %v91, %v93
  %v97 = vadd.f32 %v77, %v92
  %v98 = vadd.f32 %v78, %v94
  %v99 = vlaneseq
  %v100 = vshrl.u32 %v99, 7
  %v101 = vsub.s32 6, %v100
  %v102 = vrot.slane %v14, %v101
  %v103 = vmul.f32 %v102, %v68
  %v104 = vmul.f32 %v102, %v69
  %v105 = vmul.f32 %v102, %v70
  %vm109 = vcmask 1043456
  %v110 = vrot.slane %v103, 4
  %v111 = vrot.slane %v104, 4
  %v112 = vsel %vm109, %v110, %v111
  %v113 = vrot.slane %v105, 4
  %v114 = vsel %vm109, %v111, %v113
  %v117 = vadd.f32 %v97, %v112
  %v118 = vadd.f32 %v98, %v114
  %s119 = scalar_lea.vmem %s0, 24
  %v120 = vld [vmem:[%s119] sm:$0xff]
  %v121 = vld [vmem:[%s119 + $0x8] sm:$0xff]
  %v122 = vld [vmem:[%s119 + $0x10] sm:$0xf]
  %126 = vrot.lane.b32.xlu0 %v120, 32
  %v127 = vpop.permute.xlu0 %126
  %128 = vrot.lane.b32.xlu0 %v121, 32
  %v129 = vpop.permute.xlu0 %128
  %130 = vrot.lane.b32.xlu0 %v122, 32
  %v131 = vpop.permute.xlu0 %130
  %135 = vrot.lane.b32.xlu0 %v120, 64
  %v136 = vpop.permute.xlu0 %135
  %137 = vrot.lane.b32.xlu0 %v121, 64
  %v138 = vpop.permute.xlu0 %137
  %139 = vrot.lane.b32.xlu0 %v122, 64
  %v140 = vpop.permute.xlu0 %139
  %144 = vrot.lane.b32.xlu0 %v120, 96
  %v145 = vpop.permute.xlu0 %144
  %146 = vrot.lane.b32.xlu0 %v121, 96
  %v147 = vpop.permute.xlu0 %146
  %148 = vrot.lane.b32.xlu0 %v122, 96
  %v149 = vpop.permute.xlu0 %148
  %v153 = vsel %vm59, %v120, %v127
  %v154 = vsel %vm59, %v121, %v129
  %v155 = vsel %vm59, %v122, %v131
  %v156 = vsel %vm63, %v153, %v136
  %v157 = vsel %vm63, %v154, %v138
  %v158 = vsel %vm63, %v155, %v140
  %v159 = vsel %vm67, %v156, %v145
  %v160 = vsel %vm67, %v157, %v147
  %v161 = vsel %vm67, %v158, %v149
  %v162 = vlaneseq
  %v163 = vshrl.u32 %v162, 7
  %v164 = vsub.s32 1, %v163
  %v165 = vrot.slane %v14, %v164
  %v166 = vmul.f32 %v165, %v159
  %v167 = vmul.f32 %v165, %v160
  %v168 = vadd.f32 %v117, %v166
  %v169 = vadd.f32 %v118, %v167
  %v170 = vlaneseq
  %v171 = vshrl.u32 %v170, 7
  %v172 = vsub.s32 4, %v171
  %v173 = vrot.slane %v14, %v172
  %v174 = vmul.f32 %v173, %v159
  %v175 = vmul.f32 %v173, %v160
  %v176 = vmul.f32 %v173, %v161
  %v180 = vrot.slane %v174, 2
  %v181 = vrot.slane %v175, 2
  %v182 = vsel %vm89, %v180, %v181
  %v183 = vrot.slane %v176, 2
  %v184 = vsel %vm89, %v181, %v183
  %v187 = vadd.f32 %v168, %v182
  %v188 = vadd.f32 %v169, %v184
  %v189 = vlaneseq
  %v190 = vshrl.u32 %v189, 7
  %v191 = vsub.s32 7, %v190
  %v192 = vrot.slane %v14, %v191
  %v193 = vmul.f32 %v192, %v159
  %v194 = vmul.f32 %v192, %v160
  %v195 = vmul.f32 %v192, %v161
  %v199 = vrot.slane %v193, 4
  %v200 = vrot.slane %v194, 4
  %v201 = vsel %vm109, %v199, %v200
  %v202 = vrot.slane %v195, 4
  %v203 = vsel %vm109, %v200, %v202
  %v206 = vadd.f32 %v187, %v201
  %v207 = vadd.f32 %v188, %v203
  %s208 = scalar_lea.vmem %s0, 48
  %v209 = vld [vmem:[%s208] sm:$0xff]
  %v210 = vld [vmem:[%s208 + $0x8] sm:$0xff]
  %v211 = vld [vmem:[%s208 + $0x10] sm:$0xf]
  %215 = vrot.lane.b32.xlu0 %v209, 32
  %v216 = vpop.permute.xlu0 %215
  %217 = vrot.lane.b32.xlu0 %v210, 32
  %v218 = vpop.permute.xlu0 %217
  %219 = vrot.lane.b32.xlu0 %v211, 32
  %v220 = vpop.permute.xlu0 %219
  %224 = vrot.lane.b32.xlu0 %v209, 64
  %v225 = vpop.permute.xlu0 %224
  %226 = vrot.lane.b32.xlu0 %v210, 64
  %v227 = vpop.permute.xlu0 %226
  %228 = vrot.lane.b32.xlu0 %v211, 64
  %v229 = vpop.permute.xlu0 %228
  %233 = vrot.lane.b32.xlu0 %v209, 96
  %v234 = vpop.permute.xlu0 %233
  %235 = vrot.lane.b32.xlu0 %v210, 96
  %v236 = vpop.permute.xlu0 %235
  %237 = vrot.lane.b32.xlu0 %v211, 96
  %v238 = vpop.permute.xlu0 %237
  %v242 = vsel %vm59, %v209, %v216
  %v243 = vsel %vm59, %v210, %v218
  %v244 = vsel %vm59, %v211, %v220
  %v245 = vsel %vm63, %v242, %v225
  %v246 = vsel %vm63, %v243, %v227
  %v247 = vsel %vm63, %v244, %v229
  %v248 = vsel %vm67, %v245, %v234
  %v249 = vsel %vm67, %v246, %v236
  %v250 = vsel %vm67, %v247, %v238
  %v251 = vlaneseq
  %v252 = vshrl.u32 %v251, 7
  %v253 = vsub.s32 2, %v252
  %v254 = vrot.slane %v14, %v253
  %v255 = vmul.f32 %v254, %v248
  %v256 = vmul.f32 %v254, %v249
  %v257 = vadd.f32 %v206, %v255
  %v258 = vadd.f32 %v207, %v256
  %v259 = vlaneseq
  %v260 = vshrl.u32 %v259, 7
  %v261 = vsub.s32 5, %v260
  %v262 = vrot.slane %v14, %v261
  %v263 = vmul.f32 %v262, %v248
  %v264 = vmul.f32 %v262, %v249
  %v265 = vmul.f32 %v262, %v250
  %v269 = vrot.slane %v263, 2
  %v270 = vrot.slane %v264, 2
  %v271 = vsel %vm89, %v269, %v270
  %v272 = vrot.slane %v265, 2
  %v273 = vsel %vm89, %v270, %v272
  %v276 = vadd.f32 %v257, %v271
  %v277 = vadd.f32 %v258, %v273
  %v278 = vlaneseq
  %v279 = vshrl.u32 %v278, 7
  %v280 = vsub.s32 0, %v279
  %v281 = vrot.slane %v15, %v280
  %v282 = vmul.f32 %v281, %v248
  %v283 = vmul.f32 %v281, %v249
  %v284 = vmul.f32 %v281, %v250
  %v288 = vrot.slane %v282, 4
  %v289 = vrot.slane %v283, 4
  %v290 = vsel %vm109, %v288, %v289
  %v291 = vrot.slane %v284, 4
  %v292 = vsel %vm109, %v289, %v291
  %v295 = vadd.f32 %v276, %v290
  %v296 = vadd.f32 %v277, %v292
  %s297 = scalar_lea.vmem %s0, 72
  %v298 = vld [vmem:[%s297] sm:$0xff]
  %v299 = vld [vmem:[%s297 + $0x8] sm:$0xff]
  %v300 = vld [vmem:[%s297 + $0x10] sm:$0xf]
  %304 = vrot.lane.b32.xlu0 %v298, 32
  %v305 = vpop.permute.xlu0 %304
  %306 = vrot.lane.b32.xlu0 %v299, 32
  %v307 = vpop.permute.xlu0 %306
  %308 = vrot.lane.b32.xlu0 %v300, 32
  %v309 = vpop.permute.xlu0 %308
  %313 = vrot.lane.b32.xlu0 %v298, 64
  %v314 = vpop.permute.xlu0 %313
  %315 = vrot.lane.b32.xlu0 %v299, 64
  %v316 = vpop.permute.xlu0 %315
  %317 = vrot.lane.b32.xlu0 %v300, 64
  %v318 = vpop.permute.xlu0 %317
  %322 = vrot.lane.b32.xlu0 %v298, 96
  %v323 = vpop.permute.xlu0 %322
  %324 = vrot.lane.b32.xlu0 %v299, 96
  %v325 = vpop.permute.xlu0 %324
  %326 = vrot.lane.b32.xlu0 %v300, 96
  %v327 = vpop.permute.xlu0 %326
  %v331 = vsel %vm59, %v298, %v305
  %v332 = vsel %vm59, %v299, %v307
  %v333 = vsel %vm59, %v300, %v309
  %v334 = vsel %vm63, %v331, %v314
  %v335 = vsel %vm63, %v332, %v316
  %v336 = vsel %vm63, %v333, %v318
  %v337 = vsel %vm67, %v334, %v323
  %v338 = vsel %vm67, %v335, %v325
  %v339 = vsel %vm67, %v336, %v327
  %v340 = vlaneseq
  %v341 = vshrl.u32 %v340, 7
  %v342 = vsub.s32 1, %v341
  %v343 = vrot.slane %v15, %v342
  %v344 = vmul.f32 %v343, %v337
  %v345 = vmul.f32 %v343, %v338
  %v346 = vadd.f32 %v295, %v344
  %v347 = vadd.f32 %v296, %v345
  %v348 = vlaneseq
  %v349 = vshrl.u32 %v348, 7
  %v350 = vsub.s32 4, %v349
  %v351 = vrot.slane %v15, %v350
  %v352 = vmul.f32 %v351, %v337
  %v353 = vmul.f32 %v351, %v338
  %v354 = vmul.f32 %v351, %v339
  %v358 = vrot.slane %v352, 2
  %v359 = vrot.slane %v353, 2
  %v360 = vsel %vm89, %v358, %v359
  %v361 = vrot.slane %v354, 2
  %v362 = vsel %vm89, %v359, %v361
  %v365 = vadd.f32 %v346, %v360
  %v366 = vadd.f32 %v347, %v362
  %v367 = vlaneseq
  %v368 = vshrl.u32 %v367, 7
  %v369 = vsub.s32 7, %v368
  %v370 = vrot.slane %v15, %v369
  %v371 = vmul.f32 %v370, %v337
  %v372 = vmul.f32 %v370, %v338
  %v373 = vmul.f32 %v370, %v339
  %v377 = vrot.slane %v371, 4
  %v378 = vrot.slane %v372, 4
  %v379 = vsel %vm109, %v377, %v378
  %v380 = vrot.slane %v373, 4
  %v381 = vsel %vm109, %v378, %v380
  %v384 = vadd.f32 %v365, %v379
  %v385 = vadd.f32 %v366, %v381
  %s386 = scalar_lea.vmem %s0, 96
  %v387 = vld [vmem:[%s386] sm:$0xff]
  %v388 = vld [vmem:[%s386 + $0x8] sm:$0xff]
  %v389 = vld [vmem:[%s386 + $0x10] sm:$0xf]
  %393 = vrot.lane.b32.xlu0 %v387, 32
  %v394 = vpop.permute.xlu0 %393
  %395 = vrot.lane.b32.xlu0 %v388, 32
  %v396 = vpop.permute.xlu0 %395
  %397 = vrot.lane.b32.xlu0 %v389, 32
  %v398 = vpop.permute.xlu0 %397
  %402 = vrot.lane.b32.xlu0 %v387, 64
  %v403 = vpop.permute.xlu0 %402
  %404 = vrot.lane.b32.xlu0 %v388, 64
  %v405 = vpop.permute.xlu0 %404
  %406 = vrot.lane.b32.xlu0 %v389, 64
  %v407 = vpop.permute.xlu0 %406
  %411 = vrot.lane.b32.xlu0 %v387, 96
  %v412 = vpop.permute.xlu0 %411
  %413 = vrot.lane.b32.xlu0 %v388, 96
  %v414 = vpop.permute.xlu0 %413
  %415 = vrot.lane.b32.xlu0 %v389, 96
  %v416 = vpop.permute.xlu0 %415
  %v420 = vsel %vm59, %v387, %v394
  %v421 = vsel %vm59, %v388, %v396
  %v422 = vsel %vm59, %v389, %v398
  %v423 = vsel %vm63, %v420, %v403
  %v424 = vsel %vm63, %v421, %v405
  %v425 = vsel %vm63, %v422, %v407
  %v426 = vsel %vm67, %v423, %v412
  %v427 = vsel %vm67, %v424, %v414
  %v428 = vsel %vm67, %v425, %v416
  %v429 = vlaneseq
  %v430 = vshrl.u32 %v429, 7
  %v431 = vsub.s32 2, %v430
  %v432 = vrot.slane %v15, %v431
  %v433 = vmul.f32 %v432, %v426
  %v434 = vmul.f32 %v432, %v427
  %v435 = vadd.f32 %v384, %v433
  %v436 = vadd.f32 %v385, %v434
  %v437 = vlaneseq
  %v438 = vshrl.u32 %v437, 7
  %v439 = vsub.s32 5, %v438
  %v440 = vrot.slane %v15, %v439
  %v441 = vmul.f32 %v440, %v426
  %v442 = vmul.f32 %v440, %v427
  %v443 = vmul.f32 %v440, %v428
  %v447 = vrot.slane %v441, 2
  %v448 = vrot.slane %v442, 2
  %v449 = vsel %vm89, %v447, %v448
  %v450 = vrot.slane %v443, 2
  %v451 = vsel %vm89, %v448, %v450
  %v454 = vadd.f32 %v435, %v449
  %v455 = vadd.f32 %v436, %v451
  %v456 = vlaneseq
  %v457 = vshrl.u32 %v456, 7
  %v458 = vsub.s32 0, %v457
  %v459 = vrot.slane %v16, %v458
  %v460 = vmul.f32 %v459, %v426
  %v461 = vmul.f32 %v459, %v427
  %v462 = vmul.f32 %v459, %v428
  %v466 = vrot.slane %v460, 4
  %v467 = vrot.slane %v461, 4
  %v468 = vsel %vm109, %v466, %v467
  %v469 = vrot.slane %v462, 4
  %v470 = vsel %vm109, %v467, %v469
  %v473 = vadd.f32 %v454, %v468
  %v474 = vadd.f32 %v455, %v470
  %s475 = scalar_lea.vmem %s0, 120
  %v476 = vld [vmem:[%s475] sm:$0xff]
  %v477 = vld [vmem:[%s475 + $0x8] sm:$0xff]
  %v478 = vld [vmem:[%s475 + $0x10] sm:$0xf]
  %482 = vrot.lane.b32.xlu0 %v476, 32
  %v483 = vpop.permute.xlu0 %482
  %484 = vrot.lane.b32.xlu0 %v477, 32
  %v485 = vpop.permute.xlu0 %484
  %486 = vrot.lane.b32.xlu0 %v478, 32
  %v487 = vpop.permute.xlu0 %486
  %491 = vrot.lane.b32.xlu0 %v476, 64
  %v492 = vpop.permute.xlu0 %491
  %493 = vrot.lane.b32.xlu0 %v477, 64
  %v494 = vpop.permute.xlu0 %493
  %495 = vrot.lane.b32.xlu0 %v478, 64
  %v496 = vpop.permute.xlu0 %495
  %500 = vrot.lane.b32.xlu0 %v476, 96
  %v501 = vpop.permute.xlu0 %500
  %502 = vrot.lane.b32.xlu0 %v477, 96
  %v503 = vpop.permute.xlu0 %502
  %504 = vrot.lane.b32.xlu0 %v478, 96
  %v505 = vpop.permute.xlu0 %504
  %v509 = vsel %vm59, %v476, %v483
  %v510 = vsel %vm59, %v477, %v485
  %v511 = vsel %vm59, %v478, %v487
  %v512 = vsel %vm63, %v509, %v492
  %v513 = vsel %vm63, %v510, %v494
  %v514 = vsel %vm63, %v511, %v496
  %v515 = vsel %vm67, %v512, %v501
  %v516 = vsel %vm67, %v513, %v503
  %v517 = vsel %vm67, %v514, %v505
  %v518 = vlaneseq
  %v519 = vshrl.u32 %v518, 7
  %v520 = vsub.s32 3, %v519
  %v521 = vrot.slane %v15, %v520
  %v522 = vmul.f32 %v521, %v515
  %v523 = vmul.f32 %v521, %v516
  %v524 = vadd.f32 %v473, %v522
  %v525 = vadd.f32 %v474, %v523
  %v526 = vlaneseq
  %v527 = vshrl.u32 %v526, 7
  %v528 = vsub.s32 6, %v527
  %v529 = vrot.slane %v15, %v528
  %v530 = vmul.f32 %v529, %v515
  %v531 = vmul.f32 %v529, %v516
  %v532 = vmul.f32 %v529, %v517
  %v536 = vrot.slane %v530, 2
  %v537 = vrot.slane %v531, 2
  %v538 = vsel %vm89, %v536, %v537
  %v539 = vrot.slane %v532, 2
  %v540 = vsel %vm89, %v537, %v539
  %v543 = vadd.f32 %v524, %v538
  %v544 = vadd.f32 %v525, %v540
  %v545 = vlaneseq
  %v546 = vshrl.u32 %v545, 7
  %v547 = vsub.s32 1, %v546
  %v548 = vrot.slane %v16, %v547
  %v549 = vmul.f32 %v548, %v515
  %v550 = vmul.f32 %v548, %v516
  %v551 = vmul.f32 %v548, %v517
  %v555 = vrot.slane %v549, 4
  %v556 = vrot.slane %v550, 4
  %v557 = vsel %vm109, %v555, %v556
  %v558 = vrot.slane %v551, 4
  %v559 = vsel %vm109, %v556, %v558
  %v562 = vadd.f32 %v543, %v557
  %v563 = vadd.f32 %v544, %v559
  %s564 = scalar_lea.vmem %s0, 144
  %v565 = vld [vmem:[%s564] sm:$0xff]
  %v566 = vld [vmem:[%s564 + $0x8] sm:$0xff]
  %v567 = vld [vmem:[%s564 + $0x10] sm:$0xf]
  %571 = vrot.lane.b32.xlu0 %v565, 32
  %v572 = vpop.permute.xlu0 %571
  %573 = vrot.lane.b32.xlu0 %v566, 32
  %v574 = vpop.permute.xlu0 %573
  %575 = vrot.lane.b32.xlu0 %v567, 32
  %v576 = vpop.permute.xlu0 %575
  %580 = vrot.lane.b32.xlu0 %v565, 64
  %v581 = vpop.permute.xlu0 %580
  %582 = vrot.lane.b32.xlu0 %v566, 64
  %v583 = vpop.permute.xlu0 %582
  %584 = vrot.lane.b32.xlu0 %v567, 64
  %v585 = vpop.permute.xlu0 %584
  %589 = vrot.lane.b32.xlu0 %v565, 96
  %v590 = vpop.permute.xlu0 %589
  %591 = vrot.lane.b32.xlu0 %v566, 96
  %v592 = vpop.permute.xlu0 %591
  %593 = vrot.lane.b32.xlu0 %v567, 96
  %v594 = vpop.permute.xlu0 %593
  %v598 = vsel %vm59, %v565, %v572
  %v599 = vsel %vm59, %v566, %v574
  %v600 = vsel %vm59, %v567, %v576
  %v601 = vsel %vm63, %v598, %v581
  %v602 = vsel %vm63, %v599, %v583
  %v603 = vsel %vm63, %v600, %v585
  %v604 = vsel %vm67, %v601, %v590
  %v605 = vsel %vm67, %v602, %v592
  %v606 = vsel %vm67, %v603, %v594
  %v607 = vlaneseq
  %v608 = vshrl.u32 %v607, 7
  %v609 = vsub.s32 2, %v608
  %v610 = vrot.slane %v16, %v609
  %v611 = vmul.f32 %v610, %v604
  %v612 = vmul.f32 %v610, %v605
  %v613 = vadd.f32 %v562, %v611
  %v614 = vadd.f32 %v563, %v612
  %v615 = vlaneseq
  %v616 = vshrl.u32 %v615, 7
  %v617 = vsub.s32 5, %v616
  %v618 = vrot.slane %v16, %v617
  %v619 = vmul.f32 %v618, %v604
  %v620 = vmul.f32 %v618, %v605
  %v621 = vmul.f32 %v618, %v606
  %v625 = vrot.slane %v619, 2
  %v626 = vrot.slane %v620, 2
  %v627 = vsel %vm89, %v625, %v626
  %v628 = vrot.slane %v621, 2
  %v629 = vsel %vm89, %v626, %v628
  %v632 = vadd.f32 %v613, %v627
  %v633 = vadd.f32 %v614, %v629
  %v634 = vlaneseq
  %v635 = vshrl.u32 %v634, 7
  %v636 = vsub.s32 0, %v635
  %v637 = vrot.slane %v17, %v636
  %v638 = vmul.f32 %v637, %v604
  %v639 = vmul.f32 %v637, %v605
  %v640 = vmul.f32 %v637, %v606
  %v644 = vrot.slane %v638, 4
  %v645 = vrot.slane %v639, 4
  %v646 = vsel %vm109, %v644, %v645
  %v647 = vrot.slane %v640, 4
  %v648 = vsel %vm109, %v645, %v647
  %v651 = vadd.f32 %v632, %v646
  %v652 = vadd.f32 %v633, %v648
  %s653 = scalar_lea.vmem %s0, 168
  %v654 = vld [vmem:[%s653] sm:$0xff]
  %v655 = vld [vmem:[%s653 + $0x8] sm:$0xff]
  %v656 = vld [vmem:[%s653 + $0x10] sm:$0xf]
  %660 = vrot.lane.b32.xlu0 %v654, 32
  %v661 = vpop.permute.xlu0 %660
  %662 = vrot.lane.b32.xlu0 %v655, 32
  %v663 = vpop.permute.xlu0 %662
  %664 = vrot.lane.b32.xlu0 %v656, 32
  %v665 = vpop.permute.xlu0 %664
  %669 = vrot.lane.b32.xlu0 %v654, 64
  %v670 = vpop.permute.xlu0 %669
  %671 = vrot.lane.b32.xlu0 %v655, 64
  %v672 = vpop.permute.xlu0 %671
  %673 = vrot.lane.b32.xlu0 %v656, 64
  %v674 = vpop.permute.xlu0 %673
  %678 = vrot.lane.b32.xlu0 %v654, 96
  %v679 = vpop.permute.xlu0 %678
  %680 = vrot.lane.b32.xlu0 %v655, 96
  %v681 = vpop.permute.xlu0 %680
  %682 = vrot.lane.b32.xlu0 %v656, 96
  %v683 = vpop.permute.xlu0 %682
  %v687 = vsel %vm59, %v654, %v661
  %v688 = vsel %vm59, %v655, %v663
  %v689 = vsel %vm59, %v656, %v665
  %v690 = vsel %vm63, %v687, %v670
  %v691 = vsel %vm63, %v688, %v672
  %v692 = vsel %vm63, %v689, %v674
  %v693 = vsel %vm67, %v690, %v679
  %v694 = vsel %vm67, %v691, %v681
  %v695 = vsel %vm67, %v692, %v683
  %v696 = vlaneseq
  %v697 = vshrl.u32 %v696, 7
  %v698 = vsub.s32 3, %v697
  %v699 = vrot.slane %v16, %v698
  %v700 = vmul.f32 %v699, %v693
  %v701 = vmul.f32 %v699, %v694
  %v702 = vadd.f32 %v651, %v700
  %v703 = vadd.f32 %v652, %v701
  %v704 = vlaneseq
  %v705 = vshrl.u32 %v704, 7
  %v706 = vsub.s32 6, %v705
  %v707 = vrot.slane %v16, %v706
  %v708 = vmul.f32 %v707, %v693
  %v709 = vmul.f32 %v707, %v694
  %v710 = vmul.f32 %v707, %v695
  %v714 = vrot.slane %v708, 2
  %v715 = vrot.slane %v709, 2
  %v716 = vsel %vm89, %v714, %v715
  %v717 = vrot.slane %v710, 2
  %v718 = vsel %vm89, %v715, %v717
  %v721 = vadd.f32 %v702, %v716
  %v722 = vadd.f32 %v703, %v718
  %v723 = vlaneseq
  %v724 = vshrl.u32 %v723, 7
  %v725 = vsub.s32 1, %v724
  %v726 = vrot.slane %v17, %v725
  %v727 = vmul.f32 %v726, %v693
  %v728 = vmul.f32 %v726, %v694
  %v729 = vmul.f32 %v726, %v695
  %v733 = vrot.slane %v727, 4
  %v734 = vrot.slane %v728, 4
  %v735 = vsel %vm109, %v733, %v734
  %v736 = vrot.slane %v729, 4
  %v737 = vsel %vm109, %v734, %v736
  %v740 = vadd.f32 %v721, %v735
  %v741 = vadd.f32 %v722, %v737
  %s742 = scalar_lea.vmem %s0, 192
  %v743 = vld [vmem:[%s742] sm:$0xff]
  %v744 = vld [vmem:[%s742 + $0x8] sm:$0xff]
  %v745 = vld [vmem:[%s742 + $0x10] sm:$0xf]
  %749 = vrot.lane.b32.xlu0 %v743, 32
  %v750 = vpop.permute.xlu0 %749
  %751 = vrot.lane.b32.xlu0 %v744, 32
  %v752 = vpop.permute.xlu0 %751
  %753 = vrot.lane.b32.xlu0 %v745, 32
  %v754 = vpop.permute.xlu0 %753
  %758 = vrot.lane.b32.xlu0 %v743, 64
  %v759 = vpop.permute.xlu0 %758
  %760 = vrot.lane.b32.xlu0 %v744, 64
  %v761 = vpop.permute.xlu0 %760
  %762 = vrot.lane.b32.xlu0 %v745, 64
  %v763 = vpop.permute.xlu0 %762
  %767 = vrot.lane.b32.xlu0 %v743, 96
  %v768 = vpop.permute.xlu0 %767
  %769 = vrot.lane.b32.xlu0 %v744, 96
  %v770 = vpop.permute.xlu0 %769
  %771 = vrot.lane.b32.xlu0 %v745, 96
  %v772 = vpop.permute.xlu0 %771
  %v776 = vsel %vm59, %v743, %v750
  %v777 = vsel %vm59, %v744, %v752
  %v778 = vsel %vm59, %v745, %v754
  %v779 = vsel %vm63, %v776, %v759
  %v780 = vsel %vm63, %v777, %v761
  %v781 = vsel %vm63, %v778, %v763
  %v782 = vsel %vm67, %v779, %v768
  %v783 = vsel %vm67, %v780, %v770
  %v784 = vsel %vm67, %v781, %v772
  %v785 = vlaneseq
  %v786 = vshrl.u32 %v785, 7
  %v787 = vsub.s32 4, %v786
  %v788 = vrot.slane %v16, %v787
  %v789 = vmul.f32 %v788, %v782
  %v790 = vmul.f32 %v788, %v783
  %v791 = vadd.f32 %v740, %v789
  %v792 = vadd.f32 %v741, %v790
  %v793 = vlaneseq
  %v794 = vshrl.u32 %v793, 7
  %v795 = vsub.s32 7, %v794
  %v796 = vrot.slane %v16, %v795
  %v797 = vmul.f32 %v796, %v782
  %v798 = vmul.f32 %v796, %v783
  %v799 = vmul.f32 %v796, %v784
  %v803 = vrot.slane %v797, 2
  %v804 = vrot.slane %v798, 2
  %v805 = vsel %vm89, %v803, %v804
  %v806 = vrot.slane %v799, 2
  %v807 = vsel %vm89, %v804, %v806
  %v810 = vadd.f32 %v791, %v805
  %v811 = vadd.f32 %v792, %v807
  %v812 = vlaneseq
  %v813 = vshrl.u32 %v812, 7
  %v814 = vsub.s32 2, %v813
  %v815 = vrot.slane %v17, %v814
  %v816 = vmul.f32 %v815, %v782
  %v817 = vmul.f32 %v815, %v783
  %v818 = vmul.f32 %v815, %v784
  %v822 = vrot.slane %v816, 4
  %v823 = vrot.slane %v817, 4
  %v824 = vsel %vm109, %v822, %v823
  %v825 = vrot.slane %v818, 4
  %v826 = vsel %vm109, %v823, %v825
  %v829 = vadd.f32 %v810, %v824
  %v830 = vadd.f32 %v811, %v826
  %s831 = scalar_lea.vmem %s0, 216
  %v832 = vld [vmem:[%s831] sm:$0xff]
  %v833 = vld [vmem:[%s831 + $0x8] sm:$0xff]
  %v834 = vld [vmem:[%s831 + $0x10] sm:$0xf]
  %838 = vrot.lane.b32.xlu0 %v832, 32
  %v839 = vpop.permute.xlu0 %838
  %840 = vrot.lane.b32.xlu0 %v833, 32
  %v841 = vpop.permute.xlu0 %840
  %842 = vrot.lane.b32.xlu0 %v834, 32
  %v843 = vpop.permute.xlu0 %842
  %847 = vrot.lane.b32.xlu0 %v832, 64
  %v848 = vpop.permute.xlu0 %847
  %849 = vrot.lane.b32.xlu0 %v833, 64
  %v850 = vpop.permute.xlu0 %849
  %851 = vrot.lane.b32.xlu0 %v834, 64
  %v852 = vpop.permute.xlu0 %851
  %856 = vrot.lane.b32.xlu0 %v832, 96
  %v857 = vpop.permute.xlu0 %856
  %858 = vrot.lane.b32.xlu0 %v833, 96
  %v859 = vpop.permute.xlu0 %858
  %860 = vrot.lane.b32.xlu0 %v834, 96
  %v861 = vpop.permute.xlu0 %860
  %v865 = vsel %vm59, %v832, %v839
  %v866 = vsel %vm59, %v833, %v841
  %v867 = vsel %vm59, %v834, %v843
  %v868 = vsel %vm63, %v865, %v848
  %v869 = vsel %vm63, %v866, %v850
  %v870 = vsel %vm63, %v867, %v852
  %v871 = vsel %vm67, %v868, %v857
  %v872 = vsel %vm67, %v869, %v859
  %v873 = vsel %vm67, %v870, %v861
  %v874 = vlaneseq
  %v875 = vshrl.u32 %v874, 7
  %v876 = vsub.s32 3, %v875
  %v877 = vrot.slane %v17, %v876
  %v878 = vmul.f32 %v877, %v871
  %v879 = vmul.f32 %v877, %v872
  %v880 = vadd.f32 %v829, %v878
  %v881 = vadd.f32 %v830, %v879
  %v882 = vlaneseq
  %v883 = vshrl.u32 %v882, 7
  %v884 = vsub.s32 6, %v883
  %v885 = vrot.slane %v17, %v884
  %v886 = vmul.f32 %v885, %v871
  %v887 = vmul.f32 %v885, %v872
  %v888 = vmul.f32 %v885, %v873
  %v892 = vrot.slane %v886, 2
  %v893 = vrot.slane %v887, 2
  %v894 = vsel %vm89, %v892, %v893
  %v895 = vrot.slane %v888, 2
  %v896 = vsel %vm89, %v893, %v895
  %v899 = vadd.f32 %v880, %v894
  %v900 = vadd.f32 %v881, %v896
  %v901 = vlaneseq
  %v902 = vshrl.u32 %v901, 7
  %v903 = vsub.s32 1, %v902
  %v904 = vrot.slane %v18, %v903
  %v905 = vmul.f32 %v904, %v871
  %v906 = vmul.f32 %v904, %v872
  %v907 = vmul.f32 %v904, %v873
  %v911 = vrot.slane %v905, 4
  %v912 = vrot.slane %v906, 4
  %v913 = vsel %vm109, %v911, %v912
  %v914 = vrot.slane %v907, 4
  %v915 = vsel %vm109, %v912, %v914
  %v918 = vadd.f32 %v899, %v913
  %v919 = vadd.f32 %v900, %v915
  %s920 = scalar_lea.vmem %s0, 240
  %v921 = vld [vmem:[%s920] sm:$0xff]
  %v922 = vld [vmem:[%s920 + $0x8] sm:$0xff]
  %v923 = vld [vmem:[%s920 + $0x10] sm:$0xf]
  %927 = vrot.lane.b32.xlu0 %v921, 32
  %v928 = vpop.permute.xlu0 %927
  %929 = vrot.lane.b32.xlu0 %v922, 32
  %v930 = vpop.permute.xlu0 %929
  %931 = vrot.lane.b32.xlu0 %v923, 32
  %v932 = vpop.permute.xlu0 %931
  %936 = vrot.lane.b32.xlu0 %v921, 64
  %v937 = vpop.permute.xlu0 %936
  %938 = vrot.lane.b32.xlu0 %v922, 64
  %v939 = vpop.permute.xlu0 %938
  %940 = vrot.lane.b32.xlu0 %v923, 64
  %v941 = vpop.permute.xlu0 %940
  %945 = vrot.lane.b32.xlu0 %v921, 96
  %v946 = vpop.permute.xlu0 %945
  %947 = vrot.lane.b32.xlu0 %v922, 96
  %v948 = vpop.permute.xlu0 %947
  %949 = vrot.lane.b32.xlu0 %v923, 96
  %v950 = vpop.permute.xlu0 %949
  %v954 = vsel %vm59, %v921, %v928
  %v955 = vsel %vm59, %v922, %v930
  %v956 = vsel %vm59, %v923, %v932
  %v957 = vsel %vm63, %v954, %v937
  %v958 = vsel %vm63, %v955, %v939
  %v959 = vsel %vm63, %v956, %v941
  %v960 = vsel %vm67, %v957, %v946
  %v961 = vsel %vm67, %v958, %v948
  %v962 = vsel %vm67, %v959, %v950
  %v963 = vlaneseq
  %v964 = vshrl.u32 %v963, 7
  %v965 = vsub.s32 4, %v964
  %v966 = vrot.slane %v17, %v965
  %v967 = vmul.f32 %v966, %v960
  %v968 = vmul.f32 %v966, %v961
  %v969 = vadd.f32 %v918, %v967
  %v970 = vadd.f32 %v919, %v968
  %v971 = vlaneseq
  %v972 = vshrl.u32 %v971, 7
  %v973 = vsub.s32 7, %v972
  %v974 = vrot.slane %v17, %v973
  %v975 = vmul.f32 %v974, %v960
  %v976 = vmul.f32 %v974, %v961
  %v977 = vmul.f32 %v974, %v962
  %v981 = vrot.slane %v975, 2
  %v982 = vrot.slane %v976, 2
  %v983 = vsel %vm89, %v981, %v982
  %v984 = vrot.slane %v977, 2
  %v985 = vsel %vm89, %v982, %v984
  %v988 = vadd.f32 %v969, %v983
  %v989 = vadd.f32 %v970, %v985
  %v990 = vlaneseq
  %v991 = vshrl.u32 %v990, 7
  %v992 = vsub.s32 2, %v991
  %v993 = vrot.slane %v18, %v992
  %v994 = vmul.f32 %v993, %v960
  %v995 = vmul.f32 %v993, %v961
  %v996 = vmul.f32 %v993, %v962
  %v1000 = vrot.slane %v994, 4
  %v1001 = vrot.slane %v995, 4
  %v1002 = vsel %vm109, %v1000, %v1001
  %v1003 = vrot.slane %v996, 4
  %v1004 = vsel %vm109, %v1001, %v1003
  %v1007 = vadd.f32 %v988, %v1002
  %v1008 = vadd.f32 %v989, %v1004
  %s1009 = scalar_lea.vmem %s0, 264
  %v1010 = vld [vmem:[%s1009] sm:$0xff]
  %v1011 = vld [vmem:[%s1009 + $0x8] sm:$0xff]
  %v1012 = vld [vmem:[%s1009 + $0x10] sm:$0xf]
  %1016 = vrot.lane.b32.xlu0 %v1010, 32
  %v1017 = vpop.permute.xlu0 %1016
  %1018 = vrot.lane.b32.xlu0 %v1011, 32
  %v1019 = vpop.permute.xlu0 %1018
  %1020 = vrot.lane.b32.xlu0 %v1012, 32
  %v1021 = vpop.permute.xlu0 %1020
  %1025 = vrot.lane.b32.xlu0 %v1010, 64
  %v1026 = vpop.permute.xlu0 %1025
  %1027 = vrot.lane.b32.xlu0 %v1011, 64
  %v1028 = vpop.permute.xlu0 %1027
  %1029 = vrot.lane.b32.xlu0 %v1012, 64
  %v1030 = vpop.permute.xlu0 %1029
  %1034 = vrot.lane.b32.xlu0 %v1010, 96
  %v1035 = vpop.permute.xlu0 %1034
  %1036 = vrot.lane.b32.xlu0 %v1011, 96
  %v1037 = vpop.permute.xlu0 %1036
  %1038 = vrot.lane.b32.xlu0 %v1012, 96
  %v1039 = vpop.permute.xlu0 %1038
  %v1043 = vsel %vm59, %v1010, %v1017
  %v1044 = vsel %vm59, %v1011, %v1019
  %v1045 = vsel %vm59, %v1012, %v1021
  %v1046 = vsel %vm63, %v1043, %v1026
  %v1047 = vsel %vm63, %v1044, %v1028
  %v1048 = vsel %vm63, %v1045, %v1030
  %v1049 = vsel %vm67, %v1046, %v1035
  %v1050 = vsel %vm67, %v1047, %v1037
  %v1051 = vsel %vm67, %v1048, %v1039
  %v1052 = vlaneseq
  %v1053 = vshrl.u32 %v1052, 7
  %v1054 = vsub.s32 5, %v1053
  %v1055 = vrot.slane %v17, %v1054
  %v1056 = vmul.f32 %v1055, %v1049
  %v1057 = vmul.f32 %v1055, %v1050
  %v1058 = vadd.f32 %v1007, %v1056
  %v1059 = vadd.f32 %v1008, %v1057
  %v1060 = vlaneseq
  %v1061 = vshrl.u32 %v1060, 7
  %v1062 = vsub.s32 0, %v1061
  %v1063 = vrot.slane %v18, %v1062
  %v1064 = vmul.f32 %v1063, %v1049
  %v1065 = vmul.f32 %v1063, %v1050
  %v1066 = vmul.f32 %v1063, %v1051
  %v1070 = vrot.slane %v1064, 2
  %v1071 = vrot.slane %v1065, 2
  %v1072 = vsel %vm89, %v1070, %v1071
  %v1073 = vrot.slane %v1066, 2
  %v1074 = vsel %vm89, %v1071, %v1073
  %v1077 = vadd.f32 %v1058, %v1072
  %v1078 = vadd.f32 %v1059, %v1074
  %v1079 = vlaneseq
  %v1080 = vshrl.u32 %v1079, 7
  %v1081 = vsub.s32 3, %v1080
  %v1082 = vrot.slane %v18, %v1081
  %v1083 = vmul.f32 %v1082, %v1049
  %v1084 = vmul.f32 %v1082, %v1050
  %v1085 = vmul.f32 %v1082, %v1051
  %v1089 = vrot.slane %v1083, 4
  %v1090 = vrot.slane %v1084, 4
  %v1091 = vsel %vm109, %v1089, %v1090
  %v1092 = vrot.slane %v1085, 4
  %v1093 = vsel %vm109, %v1090, %v1092
  %v1096 = vadd.f32 %v1077, %v1091
  %v1097 = vadd.f32 %v1078, %v1093
  %vm1098 = vcmp.gt.f32.partialorder %v1096, 0.0
  %vm1099 = vcmp.gt.f32.partialorder %v1097, 0.0
  %v1100 = vmul.f32 %v1096, 0.294378
  %v1101 = vmul.f32 %v1097, 0.294378
  %v1102 = vsel %vm1098, %v1096, %v1100
  %v1103 = vsel %vm1099, %v1097, %v1101
  %1104 = vst [vmem:[%s3] sm:$0xff] %v1102
  %1105 = vst [vmem:[%s3 + $0x8] sm:$0xff] %v1103
  %s1106 = scalar_lea.vmem %s1, 40
  %v1107 = vld [vmem:[%s1106] sm:$0xff]
  %v1108 = vld [vmem:[%s1106 + $0x8] sm:$0xff]
  %v1109 = vld [vmem:[%s1106 + $0x10] sm:$0xff]
  %v1110 = vld [vmem:[%s1106 + $0x18] sm:$0xff]
  %v1111 = vld [vmem:[%s1106 + $0x20] sm:$0xf]
  %s1112 = scalar_lea.vmem %s2, 1
  %v1113 = vld [vmem:[%s1112] sm:$0x1]
  %v1115 = vlaneseq
  %v1116 = vshrl.u32 %v1115, 7
  %v1117 = vsub.s32 0, %v1116
  %v1118 = vrot.slane %v1113, %v1117
  %s1120 = scalar_lea.vmem %s0, 288
  %v1121 = vld [vmem:[%s1120] sm:$0xff]
  %v1122 = vld [vmem:[%s1120 + $0x8] sm:$0xff]
  %v1123 = vld [vmem:[%s1120 + $0x10] sm:$0xf]
  %1127 = vrot.lane.b32.xlu0 %v1121, 32
  %v1128 = vpop.permute.xlu0 %1127
  %1129 = vrot.lane.b32.xlu0 %v1122, 32
  %v1130 = vpop.permute.xlu0 %1129
  %1131 = vrot.lane.b32.xlu0 %v1123, 32
  %v1132 = vpop.permute.xlu0 %1131
  %1136 = vrot.lane.b32.xlu0 %v1121, 64
  %v1137 = vpop.permute.xlu0 %1136
  %1138 = vrot.lane.b32.xlu0 %v1122, 64
  %v1139 = vpop.permute.xlu0 %1138
  %1140 = vrot.lane.b32.xlu0 %v1123, 64
  %v1141 = vpop.permute.xlu0 %1140
  %1145 = vrot.lane.b32.xlu0 %v1121, 96
  %v1146 = vpop.permute.xlu0 %1145
  %1147 = vrot.lane.b32.xlu0 %v1122, 96
  %v1148 = vpop.permute.xlu0 %1147
  %1149 = vrot.lane.b32.xlu0 %v1123, 96
  %v1150 = vpop.permute.xlu0 %1149
  %v1154 = vsel %vm59, %v1121, %v1128
  %v1155 = vsel %vm59, %v1122, %v1130
  %v1156 = vsel %vm59, %v1123, %v1132
  %v1157 = vsel %vm63, %v1154, %v1137
  %v1158 = vsel %vm63, %v1155, %v1139
  %v1159 = vsel %vm63, %v1156, %v1141
  %v1160 = vsel %vm67, %v1157, %v1146
  %v1161 = vsel %vm67, %v1158, %v1148
  %v1162 = vsel %vm67, %v1159, %v1150
  %v1163 = vlaneseq
  %v1164 = vshrl.u32 %v1163, 7
  %v1165 = vsub.s32 0, %v1164
  %v1166 = vrot.slane %v1107, %v1165
  %v1167 = vmul.f32 %v1166, %v1160
  %v1168 = vmul.f32 %v1166, %v1161
  %v1169 = vadd.f32 %v1118, %v1167
  %v1170 = vadd.f32 %v1118, %v1168
  %v1171 = vlaneseq
  %v1172 = vshrl.u32 %v1171, 7
  %v1173 = vsub.s32 3, %v1172
  %v1174 = vrot.slane %v1107, %v1173
  %v1175 = vmul.f32 %v1174, %v1160
  %v1176 = vmul.f32 %v1174, %v1161
  %v1177 = vmul.f32 %v1174, %v1162
  %v1181 = vrot.slane %v1175, 2
  %v1182 = vrot.slane %v1176, 2
  %v1183 = vsel %vm89, %v1181, %v1182
  %v1184 = vrot.slane %v1177, 2
  %v1185 = vsel %vm89, %v1182, %v1184
  %v1188 = vadd.f32 %v1169, %v1183
  %v1189 = vadd.f32 %v1170, %v1185
  %v1190 = vlaneseq
  %v1191 = vshrl.u32 %v1190, 7
  %v1192 = vsub.s32 6, %v1191
  %v1193 = vrot.slane %v1107, %v1192
  %v1194 = vmul.f32 %v1193, %v1160
  %v1195 = vmul.f32 %v1193, %v1161
  %v1196 = vmul.f32 %v1193, %v1162
  %v1200 = vrot.slane %v1194, 4
  %v1201 = vrot.slane %v1195, 4
  %v1202 = vsel %vm109, %v1200, %v1201
  %v1203 = vrot.slane %v1196, 4
  %v1204 = vsel %vm109, %v1201, %v1203
  %v1207 = vadd.f32 %v1188, %v1202
  %v1208 = vadd.f32 %v1189, %v1204
  %s1209 = scalar_lea.vmem %s0, 312
  %v1210 = vld [vmem:[%s1209] sm:$0xff]
  %v1211 = vld [vmem:[%s1209 + $0x8] sm:$0xff]
  %v1212 = vld [vmem:[%s1209 + $0x10] sm:$0xf]
  %1216 = vrot.lane.b32.xlu0 %v1210, 32
  %v1217 = vpop.permute.xlu0 %1216
  %1218 = vrot.lane.b32.xlu0 %v1211, 32
  %v1219 = vpop.permute.xlu0 %1218
  %1220 = vrot.lane.b32.xlu0 %v1212, 32
  %v1221 = vpop.permute.xlu0 %1220
  %1225 = vrot.lane.b32.xlu0 %v1210, 64
  %v1226 = vpop.permute.xlu0 %1225
  %1227 = vrot.lane.b32.xlu0 %v1211, 64
  %v1228 = vpop.permute.xlu0 %1227
  %1229 = vrot.lane.b32.xlu0 %v1212, 64
  %v1230 = vpop.permute.xlu0 %1229
  %1234 = vrot.lane.b32.xlu0 %v1210, 96
  %v1235 = vpop.permute.xlu0 %1234
  %1236 = vrot.lane.b32.xlu0 %v1211, 96
  %v1237 = vpop.permute.xlu0 %1236
  %1238 = vrot.lane.b32.xlu0 %v1212, 96
  %v1239 = vpop.permute.xlu0 %1238
  %v1243 = vsel %vm59, %v1210, %v1217
  %v1244 = vsel %vm59, %v1211, %v1219
  %v1245 = vsel %vm59, %v1212, %v1221
  %v1246 = vsel %vm63, %v1243, %v1226
  %v1247 = vsel %vm63, %v1244, %v1228
  %v1248 = vsel %vm63, %v1245, %v1230
  %v1249 = vsel %vm67, %v1246, %v1235
  %v1250 = vsel %vm67, %v1247, %v1237
  %v1251 = vsel %vm67, %v1248, %v1239
  %v1252 = vlaneseq
  %v1253 = vshrl.u32 %v1252, 7
  %v1254 = vsub.s32 1, %v1253
  %v1255 = vrot.slane %v1107, %v1254
  %v1256 = vmul.f32 %v1255, %v1249
  %v1257 = vmul.f32 %v1255, %v1250
  %v1258 = vadd.f32 %v1207, %v1256
  %v1259 = vadd.f32 %v1208, %v1257
  %v1260 = vlaneseq
  %v1261 = vshrl.u32 %v1260, 7
  %v1262 = vsub.s32 4, %v1261
  %v1263 = vrot.slane %v1107, %v1262
  %v1264 = vmul.f32 %v1263, %v1249
  %v1265 = vmul.f32 %v1263, %v1250
  %v1266 = vmul.f32 %v1263, %v1251
  %v1270 = vrot.slane %v1264, 2
  %v1271 = vrot.slane %v1265, 2
  %v1272 = vsel %vm89, %v1270, %v1271
  %v1273 = vrot.slane %v1266, 2
  %v1274 = vsel %vm89, %v1271, %v1273
  %v1277 = vadd.f32 %v1258, %v1272
  %v1278 = vadd.f32 %v1259, %v1274
  %v1279 = vlaneseq
  %v1280 = vshrl.u32 %v1279, 7
  %v1281 = vsub.s32 7, %v1280
  %v1282 = vrot.slane %v1107, %v1281
  %v1283 = vmul.f32 %v1282, %v1249
  %v1284 = vmul.f32 %v1282, %v1250
  %v1285 = vmul.f32 %v1282, %v1251
  %v1289 = vrot.slane %v1283, 4
  %v1290 = vrot.slane %v1284, 4
  %v1291 = vsel %vm109, %v1289, %v1290
  %v1292 = vrot.slane %v1285, 4
  %v1293 = vsel %vm109, %v1290, %v1292
  %v1296 = vadd.f32 %v1277, %v1291
  %v1297 = vadd.f32 %v1278, %v1293
  %s1298 = scalar_lea.vmem %s0, 336
  %v1299 = vld [vmem:[%s1298] sm:$0xff]
  %v1300 = vld [vmem:[%s1298 + $0x8] sm:$0xff]
  %v1301 = vld [vmem:[%s1298 + $0x10] sm:$0xf]
  %1305 = vrot.lane.b32.xlu0 %v1299, 32
  %v1306 = vpop.permute.xlu0 %1305
  %1307 = vrot.lane.b32.xlu0 %v1300, 32
  %v1308 = vpop.permute.xlu0 %1307
  %1309 = vrot.lane.b32.xlu0 %v1301, 32
  %v1310 = vpop.permute.xlu0 %1309
  %1314 = vrot.lane.b32.xlu0 %v1299, 64
  %v1315 = vpop.permute.xlu0 %1314
  %1316 = vrot.lane.b32.xlu0 %v1300, 64
  %v1317 = vpop.permute.xlu0 %1316
  %1318 = vrot.lane.b32.xlu0 %v1301, 64
  %v1319 = vpop.permute.xlu0 %1318
  %1323 = vrot.lane.b32.xlu0 %v1299, 96
  %v1324 = vpop.permute.xlu0 %1323
  %1325 = vrot.lane.b32.xlu0 %v1300, 96
  %v1326 = vpop.permute.xlu0 %1325
  %1327 = vrot.lane.b32.xlu0 %v1301, 96
  %v1328 = vpop.permute.xlu0 %1327
  %v1332 = vsel %vm59, %v1299, %v1306
  %v1333 = vsel %vm59, %v1300, %v1308
  %v1334 = vsel %vm59, %v1301, %v1310
  %v1335 = vsel %vm63, %v1332, %v1315
  %v1336 = vsel %vm63, %v1333, %v1317
  %v1337 = vsel %vm63, %v1334, %v1319
  %v1338 = vsel %vm67, %v1335, %v1324
  %v1339 = vsel %vm67, %v1336, %v1326
  %v1340 = vsel %vm67, %v1337, %v1328
  %v1341 = vlaneseq
  %v1342 = vshrl.u32 %v1341, 7
  %v1343 = vsub.s32 2, %v1342
  %v1344 = vrot.slane %v1107, %v1343
  %v1345 = vmul.f32 %v1344, %v1338
  %v1346 = vmul.f32 %v1344, %v1339
  %v1347 = vadd.f32 %v1296, %v1345
  %v1348 = vadd.f32 %v1297, %v1346
  %v1349 = vlaneseq
  %v1350 = vshrl.u32 %v1349, 7
  %v1351 = vsub.s32 5, %v1350
  %v1352 = vrot.slane %v1107, %v1351
  %v1353 = vmul.f32 %v1352, %v1338
  %v1354 = vmul.f32 %v1352, %v1339
  %v1355 = vmul.f32 %v1352, %v1340
  %v1359 = vrot.slane %v1353, 2
  %v1360 = vrot.slane %v1354, 2
  %v1361 = vsel %vm89, %v1359, %v1360
  %v1362 = vrot.slane %v1355, 2
  %v1363 = vsel %vm89, %v1360, %v1362
  %v1366 = vadd.f32 %v1347, %v1361
  %v1367 = vadd.f32 %v1348, %v1363
  %v1368 = vlaneseq
  %v1369 = vshrl.u32 %v1368, 7
  %v1370 = vsub.s32 0, %v1369
  %v1371 = vrot.slane %v1108, %v1370
  %v1372 = vmul.f32 %v1371, %v1338
  %v1373 = vmul.f32 %v1371, %v1339
  %v1374 = vmul.f32 %v1371, %v1340
  %v1378 = vrot.slane %v1372, 4
  %v1379 = vrot.slane %v1373, 4
  %v1380 = vsel %vm109, %v1378, %v1379
  %v1381 = vrot.slane %v1374, 4
  %v1382 = vsel %vm109, %v1379, %v1381
  %v1385 = vadd.f32 %v1366, %v1380
  %v1386 = vadd.f32 %v1367, %v1382
  %s1387 = scalar_lea.vmem %s0, 360
  %v1388 = vld [vmem:[%s1387] sm:$0xff]
  %v1389 = vld [vmem:[%s1387 + $0x8] sm:$0xff]
  %v1390 = vld [vmem:[%s1387 + $0x10] sm:$0xf]
  %1394 = vrot.lane.b32.xlu0 %v1388, 32
  %v1395 = vpop.permute.xlu0 %1394
  %1396 = vrot.lane.b32.xlu0 %v1389, 32
  %v1397 = vpop.permute.xlu0 %1396
  %1398 = vrot.lane.b32.xlu0 %v1390, 32
  %v1399 = vpop.permute.xlu0 %1398
  %1403 = vrot.lane.b32.xlu0 %v1388, 64
  %v1404 = vpop.permute.xlu0 %1403
  %1405 = vrot.lane.b32.xlu0 %v1389, 64
  %v1406 = vpop.permute.xlu0 %1405
  %1407 = vrot.lane.b32.xlu0 %v1390, 64
  %v1408 = vpop.permute.xlu0 %1407
  %1412 = vrot.lane.b32.xlu0 %v1388, 96
  %v1413 = vpop.permute.xlu0 %1412
  %1414 = vrot.lane.b32.xlu0 %v1389, 96
  %v1415 = vpop.permute.xlu0 %1414
  %1416 = vrot.lane.b32.xlu0 %v1390, 96
  %v1417 = vpop.permute.xlu0 %1416
  %v1421 = vsel %vm59, %v1388, %v1395
  %v1422 = vsel %vm59, %v1389, %v1397
  %v1423 = vsel %vm59, %v1390, %v1399
  %v1424 = vsel %vm63, %v1421, %v1404
  %v1425 = vsel %vm63, %v1422, %v1406
  %v1426 = vsel %vm63, %v1423, %v1408
  %v1427 = vsel %vm67, %v1424, %v1413
  %v1428 = vsel %vm67, %v1425, %v1415
  %v1429 = vsel %vm67, %v1426, %v1417
  %v1430 = vlaneseq
  %v1431 = vshrl.u32 %v1430, 7
  %v1432 = vsub.s32 1, %v1431
  %v1433 = vrot.slane %v1108, %v1432
  %v1434 = vmul.f32 %v1433, %v1427
  %v1435 = vmul.f32 %v1433, %v1428
  %v1436 = vadd.f32 %v1385, %v1434
  %v1437 = vadd.f32 %v1386, %v1435
  %v1438 = vlaneseq
  %v1439 = vshrl.u32 %v1438, 7
  %v1440 = vsub.s32 4, %v1439
  %v1441 = vrot.slane %v1108, %v1440
  %v1442 = vmul.f32 %v1441, %v1427
  %v1443 = vmul.f32 %v1441, %v1428
  %v1444 = vmul.f32 %v1441, %v1429
  %v1448 = vrot.slane %v1442, 2
  %v1449 = vrot.slane %v1443, 2
  %v1450 = vsel %vm89, %v1448, %v1449
  %v1451 = vrot.slane %v1444, 2
  %v1452 = vsel %vm89, %v1449, %v1451
  %v1455 = vadd.f32 %v1436, %v1450
  %v1456 = vadd.f32 %v1437, %v1452
  %v1457 = vlaneseq
  %v1458 = vshrl.u32 %v1457, 7
  %v1459 = vsub.s32 7, %v1458
  %v1460 = vrot.slane %v1108, %v1459
  %v1461 = vmul.f32 %v1460, %v1427
  %v1462 = vmul.f32 %v1460, %v1428
  %v1463 = vmul.f32 %v1460, %v1429
  %v1467 = vrot.slane %v1461, 4
  %v1468 = vrot.slane %v1462, 4
  %v1469 = vsel %vm109, %v1467, %v1468
  %v1470 = vrot.slane %v1463, 4
  %v1471 = vsel %vm109, %v1468, %v1470
  %v1474 = vadd.f32 %v1455, %v1469
  %v1475 = vadd.f32 %v1456, %v1471
  %s1476 = scalar_lea.vmem %s0, 384
  %v1477 = vld [vmem:[%s1476] sm:$0xff]
  %v1478 = vld [vmem:[%s1476 + $0x8] sm:$0xff]
  %v1479 = vld [vmem:[%s1476 + $0x10] sm:$0xf]
  %1483 = vrot.lane.b32.xlu0 %v1477, 32
  %v1484 = vpop.permute.xlu0 %1483
  %1485 = vrot.lane.b32.xlu0 %v1478, 32
  %v1486 = vpop.permute.xlu0 %1485
  %1487 = vrot.lane.b32.xlu0 %v1479, 32
  %v1488 = vpop.permute.xlu0 %1487
  %1492 = vrot.lane.b32.xlu0 %v1477, 64
  %v1493 = vpop.permute.xlu0 %1492
  %1494 = vrot.lane.b32.xlu0 %v1478, 64
  %v1495 = vpop.permute.xlu0 %1494
  %1496 = vrot.lane.b32.xlu0 %v1479, 64
  %v1497 = vpop.permute.xlu0 %1496
  %1501 = vrot.lane.b32.xlu0 %v1477, 96
  %v1502 = vpop.permute.xlu0 %1501
  %1503 = vrot.lane.b32.xlu0 %v1478, 96
  %v1504 = vpop.permute.xlu0 %1503
  %1505 = vrot.lane.b32.xlu0 %v1479, 96
  %v1506 = vpop.permute.xlu0 %1505
  %v1510 = vsel %vm59, %v1477, %v1484
  %v1511 = vsel %vm59, %v1478, %v1486
  %v1512 = vsel %vm59, %v1479, %v1488
  %v1513 = vsel %vm63, %v1510, %v1493
  %v1514 = vsel %vm63, %v1511, %v1495
  %v1515 = vsel %vm63, %v1512, %v1497
  %v1516 = vsel %vm67, %v1513, %v1502
  %v1517 = vsel %vm67, %v1514, %v1504
  %v1518 = vsel %vm67, %v1515, %v1506
  %v1519 = vlaneseq
  %v1520 = vshrl.u32 %v1519, 7
  %v1521 = vsub.s32 2, %v1520
  %v1522 = vrot.slane %v1108, %v1521
  %v1523 = vmul.f32 %v1522, %v1516
  %v1524 = vmul.f32 %v1522, %v1517
  %v1525 = vadd.f32 %v1474, %v1523
  %v1526 = vadd.f32 %v1475, %v1524
  %v1527 = vlaneseq
  %v1528 = vshrl.u32 %v1527, 7
  %v1529 = vsub.s32 5, %v1528
  %v1530 = vrot.slane %v1108, %v1529
  %v1531 = vmul.f32 %v1530, %v1516
  %v1532 = vmul.f32 %v1530, %v1517
  %v1533 = vmul.f32 %v1530, %v1518
  %v1537 = vrot.slane %v1531, 2
  %v1538 = vrot.slane %v1532, 2
  %v1539 = vsel %vm89, %v1537, %v1538
  %v1540 = vrot.slane %v1533, 2
  %v1541 = vsel %vm89, %v1538, %v1540
  %v1544 = vadd.f32 %v1525, %v1539
  %v1545 = vadd.f32 %v1526, %v1541
  %v1546 = vlaneseq
  %v1547 = vshrl.u32 %v1546, 7
  %v1548 = vsub.s32 0, %v1547
  %v1549 = vrot.slane %v1109, %v1548
  %v1550 = vmul.f32 %v1549, %v1516
  %v1551 = vmul.f32 %v1549, %v1517
  %v1552 = vmul.f32 %v1549, %v1518
  %v1556 = vrot.slane %v1550, 4
  %v1557 = vrot.slane %v1551, 4
  %v1558 = vsel %vm109, %v1556, %v1557
  %v1559 = vrot.slane %v1552, 4
  %v1560 = vsel %vm109, %v1557, %v1559
  %v1563 = vadd.f32 %v1544, %v1558
  %v1564 = vadd.f32 %v1545, %v1560
  %s1565 = scalar_lea.vmem %s0, 408
  %v1566 = vld [vmem:[%s1565] sm:$0xff]
  %v1567 = vld [vmem:[%s1565 + $0x8] sm:$0xff]
  %v1568 = vld [vmem:[%s1565 + $0x10] sm:$0xf]
  %1572 = vrot.lane.b32.xlu0 %v1566, 32
  %v1573 = vpop.permute.xlu0 %1572
  %1574 = vrot.lane.b32.xlu0 %v1567, 32
  %v1575 = vpop.permute.xlu0 %1574
  %1576 = vrot.lane.b32.xlu0 %v1568, 32
  %v1577 = vpop.permute.xlu0 %1576
  %1581 = vrot.lane.b32.xlu0 %v1566, 64
  %v1582 = vpop.permute.xlu0 %1581
  %1583 = vrot.lane.b32.xlu0 %v1567, 64
  %v1584 = vpop.permute.xlu0 %1583
  %1585 = vrot.lane.b32.xlu0 %v1568, 64
  %v1586 = vpop.permute.xlu0 %1585
  %1590 = vrot.lane.b32.xlu0 %v1566, 96
  %v1591 = vpop.permute.xlu0 %1590
  %1592 = vrot.lane.b32.xlu0 %v1567, 96
  %v1593 = vpop.permute.xlu0 %1592
  %1594 = vrot.lane.b32.xlu0 %v1568, 96
  %v1595 = vpop.permute.xlu0 %1594
  %v1599 = vsel %vm59, %v1566, %v1573
  %v1600 = vsel %vm59, %v1567, %v1575
  %v1601 = vsel %vm59, %v1568, %v1577
  %v1602 = vsel %vm63, %v1599, %v1582
  %v1603 = vsel %vm63, %v1600, %v1584
  %v1604 = vsel %vm63, %v1601, %v1586
  %v1605 = vsel %vm67, %v1602, %v1591
  %v1606 = vsel %vm67, %v1603, %v1593
  %v1607 = vsel %vm67, %v1604, %v1595
  %v1608 = vlaneseq
  %v1609 = vshrl.u32 %v1608, 7
  %v1610 = vsub.s32 3, %v1609
  %v1611 = vrot.slane %v1108, %v1610
  %v1612 = vmul.f32 %v1611, %v1605
  %v1613 = vmul.f32 %v1611, %v1606
  %v1614 = vadd.f32 %v1563, %v1612
  %v1615 = vadd.f32 %v1564, %v1613
  %v1616 = vlaneseq
  %v1617 = vshrl.u32 %v1616, 7
  %v1618 = vsub.s32 6, %v1617
  %v1619 = vrot.slane %v1108, %v1618
  %v1620 = vmul.f32 %v1619, %v1605
  %v1621 = vmul.f32 %v1619, %v1606
  %v1622 = vmul.f32 %v1619, %v1607
  %v1626 = vrot.slane %v1620, 2
  %v1627 = vrot.slane %v1621, 2
  %v1628 = vsel %vm89, %v1626, %v1627
  %v1629 = vrot.slane %v1622, 2
  %v1630 = vsel %vm89, %v1627, %v1629
  %v1633 = vadd.f32 %v1614, %v1628
  %v1634 = vadd.f32 %v1615, %v1630
  %v1635 = vlaneseq
  %v1636 = vshrl.u32 %v1635, 7
  %v1637 = vsub.s32 1, %v1636
  %v1638 = vrot.slane %v1109, %v1637
  %v1639 = vmul.f32 %v1638, %v1605
  %v1640 = vmul.f32 %v1638, %v1606
  %v1641 = vmul.f32 %v1638, %v1607
  %v1645 = vrot.slane %v1639, 4
  %v1646 = vrot.slane %v1640, 4
  %v1647 = vsel %vm109, %v1645, %v1646
  %v1648 = vrot.slane %v1641, 4
  %v1649 = vsel %vm109, %v1646, %v1648
  %v1652 = vadd.f32 %v1633, %v1647
  %v1653 = vadd.f32 %v1634, %v1649
  %s1654 = scalar_lea.vmem %s0, 432
  %v1655 = vld [vmem:[%s1654] sm:$0xff]
  %v1656 = vld [vmem:[%s1654 + $0x8] sm:$0xff]
  %v1657 = vld [vmem:[%s1654 + $0x10] sm:$0xf]
  %1661 = vrot.lane.b32.xlu0 %v1655, 32
  %v1662 = vpop.permute.xlu0 %1661
  %1663 = vrot.lane.b32.xlu0 %v1656, 32
  %v1664 = vpop.permute.xlu0 %1663
  %1665 = vrot.lane.b32.xlu0 %v1657, 32
  %v1666 = vpop.permute.xlu0 %1665
  %1670 = vrot.lane.b32.xlu0 %v1655, 64
  %v1671 = vpop.permute.xlu0 %1670
  %1672 = vrot.lane.b32.xlu0 %v1656, 64
  %v1673 = vpop.permute.xlu0 %1672
  %1674 = vrot.lane.b32.xlu0 %v1657, 64
  %v1675 = vpop.permute.xlu0 %1674
  %1679 = vrot.lane.b32.xlu0 %v1655, 96
  %v1680 = vpop.permute.xlu0 %1679
  %1681 = vrot.lane.b32.xlu0 %v1656, 96
  %v1682 = vpop.permute.xlu0 %1681
  %1683 = vrot.lane.b32.xlu0 %v1657, 96
  %v1684 = vpop.permute.xlu0 %1683
  %v1688 = vsel %vm59, %v1655, %v1662
  %v1689 = vsel %vm59, %v1656, %v1664
  %v1690 = vsel %vm59, %v1657, %v1666
  %v1691 = vsel %vm63, %v1688, %v1671
  %v1692 = vsel %vm63, %v1689, %v1673
  %v1693 = vsel %vm63, %v1690, %v1675
  %v1694 = vsel %vm67, %v1691, %v1680
  %v1695 = vsel %vm67, %v1692, %v1682
  %v1696 = vsel %vm67, %v1693, %v1684
  %v1697 = vlaneseq
  %v1698 = vshrl.u32 %v1697, 7
  %v1699 = vsub.s32 2, %v1698
  %v1700 = vrot.slane %v1109, %v1699
  %v1701 = vmul.f32 %v1700, %v1694
  %v1702 = vmul.f32 %v1700, %v1695
  %v1703 = vadd.f32 %v1652, %v1701
  %v1704 = vadd.f32 %v1653, %v1702
  %v1705 = vlaneseq
  %v1706 = vshrl.u32 %v1705, 7
  %v1707 = vsub.s32 5, %v1706
  %v1708 = vrot.slane %v1109, %v1707
  %v1709 = vmul.f32 %v1708, %v1694
  %v1710 = vmul.f32 %v1708, %v1695
  %v1711 = vmul.f32 %v1708, %v1696
  %v1715 = vrot.slane %v1709, 2
  %v1716 = vrot.slane %v1710, 2
  %v1717 = vsel %vm89, %v1715, %v1716
  %v1718 = vrot.slane %v1711, 2
  %v1719 = vsel %vm89, %v1716, %v1718
  %v1722 = vadd.f32 %v1703, %v1717
  %v1723 = vadd.f32 %v1704, %v1719
  %v1724 = vlaneseq
  %v1725 = vshrl.u32 %v1724, 7
  %v1726 = vsub.s32 0, %v1725
  %v1727 = vrot.slane %v1110, %v1726
  %v1728 = vmul.f32 %v1727, %v1694
  %v1729 = vmul.f32 %v1727, %v1695
  %v1730 = vmul.f32 %v1727, %v1696
  %v1734 = vrot.slane %v1728, 4
  %v1735 = vrot.slane %v1729, 4
  %v1736 = vsel %vm109, %v1734, %v1735
  %v1737 = vrot.slane %v1730, 4
  %v1738 = vsel %vm109, %v1735, %v1737
  %v1741 = vadd.f32 %v1722, %v1736
  %v1742 = vadd.f32 %v1723, %v1738
  %s1743 = scalar_lea.vmem %s0, 456
  %v1744 = vld [vmem:[%s1743] sm:$0xff]
  %v1745 = vld [vmem:[%s1743 + $0x8] sm:$0xff]
  %v1746 = vld [vmem:[%s1743 + $0x10] sm:$0xf]
  %1750 = vrot.lane.b32.xlu0 %v1744, 32
  %v1751 = vpop.permute.xlu0 %1750
  %1752 = vrot.lane.b32.xlu0 %v1745, 32
  %v1753 = vpop.permute.xlu0 %1752
  %1754 = vrot.lane.b32.xlu0 %v1746, 32
  %v1755 = vpop.permute.xlu0 %1754
  %1759 = vrot.lane.b32.xlu0 %v1744, 64
  %v1760 = vpop.permute.xlu0 %1759
  %1761 = vrot.lane.b32.xlu0 %v1745, 64
  %v1762 = vpop.permute.xlu0 %1761
  %1763 = vrot.lane.b32.xlu0 %v1746, 64
  %v1764 = vpop.permute.xlu0 %1763
  %1768 = vrot.lane.b32.xlu0 %v1744, 96
  %v1769 = vpop.permute.xlu0 %1768
  %1770 = vrot.lane.b32.xlu0 %v1745, 96
  %v1771 = vpop.permute.xlu0 %1770
  %1772 = vrot.lane.b32.xlu0 %v1746, 96
  %v1773 = vpop.permute.xlu0 %1772
  %v1777 = vsel %vm59, %v1744, %v1751
  %v1778 = vsel %vm59, %v1745, %v1753
  %v1779 = vsel %vm59, %v1746, %v1755
  %v1780 = vsel %vm63, %v1777, %v1760
  %v1781 = vsel %vm63, %v1778, %v1762
  %v1782 = vsel %vm63, %v1779, %v1764
  %v1783 = vsel %vm67, %v1780, %v1769
  %v1784 = vsel %vm67, %v1781, %v1771
  %v1785 = vsel %vm67, %v1782, %v1773
  %v1786 = vlaneseq
  %v1787 = vshrl.u32 %v1786, 7
  %v1788 = vsub.s32 3, %v1787
  %v1789 = vrot.slane %v1109, %v1788
  %v1790 = vmul.f32 %v1789, %v1783
  %v1791 = vmul.f32 %v1789, %v1784
  %v1792 = vadd.f32 %v1741, %v1790
  %v1793 = vadd.f32 %v1742, %v1791
  %v1794 = vlaneseq
  %v1795 = vshrl.u32 %v1794, 7
  %v1796 = vsub.s32 6, %v1795
  %v1797 = vrot.slane %v1109, %v1796
  %v1798 = vmul.f32 %v1797, %v1783
  %v1799 = vmul.f32 %v1797, %v1784
  %v1800 = vmul.f32 %v1797, %v1785
  %v1804 = vrot.slane %v1798, 2
  %v1805 = vrot.slane %v1799, 2
  %v1806 = vsel %vm89, %v1804, %v1805
  %v1807 = vrot.slane %v1800, 2
  %v1808 = vsel %vm89, %v1805, %v1807
  %v1811 = vadd.f32 %v1792, %v1806
  %v1812 = vadd.f32 %v1793, %v1808
  %v1813 = vlaneseq
  %v1814 = vshrl.u32 %v1813, 7
  %v1815 = vsub.s32 1, %v1814
  %v1816 = vrot.slane %v1110, %v1815
  %v1817 = vmul.f32 %v1816, %v1783
  %v1818 = vmul.f32 %v1816, %v1784
  %v1819 = vmul.f32 %v1816, %v1785
  %v1823 = vrot.slane %v1817, 4
  %v1824 = vrot.slane %v1818, 4
  %v1825 = vsel %vm109, %v1823, %v1824
  %v1826 = vrot.slane %v1819, 4
  %v1827 = vsel %vm109, %v1824, %v1826
  %v1830 = vadd.f32 %v1811, %v1825
  %v1831 = vadd.f32 %v1812, %v1827
  %s1832 = scalar_lea.vmem %s0, 480
  %v1833 = vld [vmem:[%s1832] sm:$0xff]
  %v1834 = vld [vmem:[%s1832 + $0x8] sm:$0xff]
  %v1835 = vld [vmem:[%s1832 + $0x10] sm:$0xf]
  %1839 = vrot.lane.b32.xlu0 %v1833, 32
  %v1840 = vpop.permute.xlu0 %1839
  %1841 = vrot.lane.b32.xlu0 %v1834, 32
  %v1842 = vpop.permute.xlu0 %1841
  %1843 = vrot.lane.b32.xlu0 %v1835, 32
  %v1844 = vpop.permute.xlu0 %1843
  %1848 = vrot.lane.b32.xlu0 %v1833, 64
  %v1849 = vpop.permute.xlu0 %1848
  %1850 = vrot.lane.b32.xlu0 %v1834, 64
  %v1851 = vpop.permute.xlu0 %1850
  %1852 = vrot.lane.b32.xlu0 %v1835, 64
  %v1853 = vpop.permute.xlu0 %1852
  %1857 = vrot.lane.b32.xlu0 %v1833, 96
  %v1858 = vpop.permute.xlu0 %1857
  %1859 = vrot.lane.b32.xlu0 %v1834, 96
  %v1860 = vpop.permute.xlu0 %1859
  %1861 = vrot.lane.b32.xlu0 %v1835, 96
  %v1862 = vpop.permute.xlu0 %1861
  %v1866 = vsel %vm59, %v1833, %v1840
  %v1867 = vsel %vm59, %v1834, %v1842
  %v1868 = vsel %vm59, %v1835, %v1844
  %v1869 = vsel %vm63, %v1866, %v1849
  %v1870 = vsel %vm63, %v1867, %v1851
  %v1871 = vsel %vm63, %v1868, %v1853
  %v1872 = vsel %vm67, %v1869, %v1858
  %v1873 = vsel %vm67, %v1870, %v1860
  %v1874 = vsel %vm67, %v1871, %v1862
  %v1875 = vlaneseq
  %v1876 = vshrl.u32 %v1875, 7
  %v1877 = vsub.s32 4, %v1876
  %v1878 = vrot.slane %v1109, %v1877
  %v1879 = vmul.f32 %v1878, %v1872
  %v1880 = vmul.f32 %v1878, %v1873
  %v1881 = vadd.f32 %v1830, %v1879
  %v1882 = vadd.f32 %v1831, %v1880
  %v1883 = vlaneseq
  %v1884 = vshrl.u32 %v1883, 7
  %v1885 = vsub.s32 7, %v1884
  %v1886 = vrot.slane %v1109, %v1885
  %v1887 = vmul.f32 %v1886, %v1872
  %v1888 = vmul.f32 %v1886, %v1873
  %v1889 = vmul.f32 %v1886, %v1874
  %v1893 = vrot.slane %v1887, 2
  %v1894 = vrot.slane %v1888, 2
  %v1895 = vsel %vm89, %v1893, %v1894
  %v1896 = vrot.slane %v1889, 2
  %v1897 = vsel %vm89, %v1894, %v1896
  %v1900 = vadd.f32 %v1881, %v1895
  %v1901 = vadd.f32 %v1882, %v1897
  %v1902 = vlaneseq
  %v1903 = vshrl.u32 %v1902, 7
  %v1904 = vsub.s32 2, %v1903
  %v1905 = vrot.slane %v1110, %v1904
  %v1906 = vmul.f32 %v1905, %v1872
  %v1907 = vmul.f32 %v1905, %v1873
  %v1908 = vmul.f32 %v1905, %v1874
  %v1912 = vrot.slane %v1906, 4
  %v1913 = vrot.slane %v1907, 4
  %v1914 = vsel %vm109, %v1912, %v1913
  %v1915 = vrot.slane %v1908, 4
  %v1916 = vsel %vm109, %v1913, %v1915
  %v1919 = vadd.f32 %v1900, %v1914
  %v1920 = vadd.f32 %v1901, %v1916
  %s1921 = scalar_lea.vmem %s0, 504
  %v1922 = vld [vmem:[%s1921] sm:$0xff]
  %v1923 = vld [vmem:[%s1921 + $0x8] sm:$0xff]
  %v1924 = vld [vmem:[%s1921 + $0x10] sm:$0xf]
  %1928 = vrot.lane.b32.xlu0 %v1922, 32
  %v1929 = vpop.permute.xlu0 %1928
  %1930 = vrot.lane.b32.xlu0 %v1923, 32
  %v1931 = vpop.permute.xlu0 %1930
  %1932 = vrot.lane.b32.xlu0 %v1924, 32
  %v1933 = vpop.permute.xlu0 %1932
  %1937 = vrot.lane.b32.xlu0 %v1922, 64
  %v1938 = vpop.permute.xlu0 %1937
  %1939 = vrot.lane.b32.xlu0 %v1923, 64
  %v1940 = vpop.permute.xlu0 %1939
  %1941 = vrot.lane.b32.xlu0 %v1924, 64
  %v1942 = vpop.permute.xlu0 %1941
  %1946 = vrot.lane.b32.xlu0 %v1922, 96
  %v1947 = vpop.permute.xlu0 %1946
  %1948 = vrot.lane.b32.xlu0 %v1923, 96
  %v1949 = vpop.permute.xlu0 %1948
  %1950 = vrot.lane.b32.xlu0 %v1924, 96
  %v1951 = vpop.permute.xlu0 %1950
  %v1955 = vsel %vm59, %v1922, %v1929
  %v1956 = vsel %vm59, %v1923, %v1931
  %v1957 = vsel %vm59, %v1924, %v1933
  %v1958 = vsel %vm63, %v1955, %v1938
  %v1959 = vsel %vm63, %v1956, %v1940
  %v1960 = vsel %vm63, %v1957, %v1942
  %v1961 = vsel %vm67, %v1958, %v1947
  %v1962 = vsel %vm67, %v1959, %v1949
  %v1963 = vsel %vm67, %v1960, %v1951
  %v1964 = vlaneseq
  %v1965 = vshrl.u32 %v1964, 7
  %v1966 = vsub.s32 3, %v1965
  %v1967 = vrot.slane %v1110, %v1966
  %v1968 = vmul.f32 %v1967, %v1961
  %v1969 = vmul.f32 %v1967, %v1962
  %v1970 = vadd.f32 %v1919, %v1968
  %v1971 = vadd.f32 %v1920, %v1969
  %v1972 = vlaneseq
  %v1973 = vshrl.u32 %v1972, 7
  %v1974 = vsub.s32 6, %v1973
  %v1975 = vrot.slane %v1110, %v1974
  %v1976 = vmul.f32 %v1975, %v1961
  %v1977 = vmul.f32 %v1975, %v1962
  %v1978 = vmul.f32 %v1975, %v1963
  %v1982 = vrot.slane %v1976, 2
  %v1983 = vrot.slane %v1977, 2
  %v1984 = vsel %vm89, %v1982, %v1983
  %v1985 = vrot.slane %v1978, 2
  %v1986 = vsel %vm89, %v1983, %v1985
  %v1989 = vadd.f32 %v1970, %v1984
  %v1990 = vadd.f32 %v1971, %v1986
  %v1991 = vlaneseq
  %v1992 = vshrl.u32 %v1991, 7
  %v1993 = vsub.s32 1, %v1992
  %v1994 = vrot.slane %v1111, %v1993
  %v1995 = vmul.f32 %v1994, %v1961
  %v1996 = vmul.f32 %v1994, %v1962
  %v1997 = vmul.f32 %v1994, %v1963
  %v2001 = vrot.slane %v1995, 4
  %v2002 = vrot.slane %v1996, 4
  %v2003 = vsel %vm109, %v2001, %v2002
  %v2004 = vrot.slane %v1997, 4
  %v2005 = vsel %vm109, %v2002, %v2004
  %v2008 = vadd.f32 %v1989, %v2003
  %v2009 = vadd.f32 %v1990, %v2005
  %s2010 = scalar_lea.vmem %s0, 528
  %v2011 = vld [vmem:[%s2010] sm:$0xff]
  %v2012 = vld [vmem:[%s2010 + $0x8] sm:$0xff]
  %v2013 = vld [vmem:[%s2010 + $0x10] sm:$0xf]
  %2017 = vrot.lane.b32.xlu0 %v2011, 32
  %v2018 = vpop.permute.xlu0 %2017
  %2019 = vrot.lane.b32.xlu0 %v2012, 32
  %v2020 = vpop.permute.xlu0 %2019
  %2021 = vrot.lane.b32.xlu0 %v2013, 32
  %v2022 = vpop.permute.xlu0 %2021
  %2026 = vrot.lane.b32.xlu0 %v2011, 64
  %v2027 = vpop.permute.xlu0 %2026
  %2028 = vrot.lane.b32.xlu0 %v2012, 64
  %v2029 = vpop.permute.xlu0 %2028
  %2030 = vrot.lane.b32.xlu0 %v2013, 64
  %v2031 = vpop.permute.xlu0 %2030
  %2035 = vrot.lane.b32.xlu0 %v2011, 96
  %v2036 = vpop.permute.xlu0 %2035
  %2037 = vrot.lane.b32.xlu0 %v2012, 96
  %v2038 = vpop.permute.xlu0 %2037
  %2039 = vrot.lane.b32.xlu0 %v2013, 96
  %v2040 = vpop.permute.xlu0 %2039
  %v2044 = vsel %vm59, %v2011, %v2018
  %v2045 = vsel %vm59, %v2012, %v2020
  %v2046 = vsel %vm59, %v2013, %v2022
  %v2047 = vsel %vm63, %v2044, %v2027
  %v2048 = vsel %vm63, %v2045, %v2029
  %v2049 = vsel %vm63, %v2046, %v2031
  %v2050 = vsel %vm67, %v2047, %v2036
  %v2051 = vsel %vm67, %v2048, %v2038
  %v2052 = vsel %vm67, %v2049, %v2040
  %v2053 = vlaneseq
  %v2054 = vshrl.u32 %v2053, 7
  %v2055 = vsub.s32 4, %v2054
  %v2056 = vrot.slane %v1110, %v2055
  %v2057 = vmul.f32 %v2056, %v2050
  %v2058 = vmul.f32 %v2056, %v2051
  %v2059 = vadd.f32 %v2008, %v2057
  %v2060 = vadd.f32 %v2009, %v2058
  %v2061 = vlaneseq
  %v2062 = vshrl.u32 %v2061, 7
  %v2063 = vsub.s32 7, %v2062
  %v2064 = vrot.slane %v1110, %v2063
  %v2065 = vmul.f32 %v2064, %v2050
  %v2066 = vmul.f32 %v2064, %v2051
  %v2067 = vmul.f32 %v2064, %v2052
  %v2071 = vrot.slane %v2065, 2
  %v2072 = vrot.slane %v2066, 2
  %v2073 = vsel %vm89, %v2071, %v2072
  %v2074 = vrot.slane %v2067, 2
  %v2075 = vsel %vm89, %v2072, %v2074
  %v2078 = vadd.f32 %v2059, %v2073
  %v2079 = vadd.f32 %v2060, %v2075
  %v2080 = vlaneseq
  %v2081 = vshrl.u32 %v2080, 7
  %v2082 = vsub.s32 2, %v2081
  %v2083 = vrot.slane %v1111, %v2082
  %v2084 = vmul.f32 %v2083, %v2050
  %v2085 = vmul.f32 %v2083, %v2051
  %v2086 = vmul.f32 %v2083, %v2052
  %v2090 = vrot.slane %v2084, 4
  %v2091 = vrot.slane %v2085, 4
  %v2092 = vsel %vm109, %v2090, %v2091
  %v2093 = vrot.slane %v2086, 4
  %v2094 = vsel %vm109, %v2091, %v2093
  %v2097 = vadd.f32 %v2078, %v2092
  %v2098 = vadd.f32 %v2079, %v2094
  %s2099 = scalar_lea.vmem %s0, 552
  %v2100 = vld [vmem:[%s2099] sm:$0xff]
  %v2101 = vld [vmem:[%s2099 + $0x8] sm:$0xff]
  %v2102 = vld [vmem:[%s2099 + $0x10] sm:$0xf]
  %2106 = vrot.lane.b32.xlu0 %v2100, 32
  %v2107 = vpop.permute.xlu0 %2106
  %2108 = vrot.lane.b32.xlu0 %v2101, 32
  %v2109 = vpop.permute.xlu0 %2108
  %2110 = vrot.lane.b32.xlu0 %v2102, 32
  %v2111 = vpop.permute.xlu0 %2110
  %2115 = vrot.lane.b32.xlu0 %v2100, 64
  %v2116 = vpop.permute.xlu0 %2115
  %2117 = vrot.lane.b32.xlu0 %v2101, 64
  %v2118 = vpop.permute.xlu0 %2117
  %2119 = vrot.lane.b32.xlu0 %v2102, 64
  %v2120 = vpop.permute.xlu0 %2119
  %2124 = vrot.lane.b32.xlu0 %v2100, 96
  %v2125 = vpop.permute.xlu0 %2124
  %2126 = vrot.lane.b32.xlu0 %v2101, 96
  %v2127 = vpop.permute.xlu0 %2126
  %2128 = vrot.lane.b32.xlu0 %v2102, 96
  %v2129 = vpop.permute.xlu0 %2128
  %v2133 = vsel %vm59, %v2100, %v2107
  %v2134 = vsel %vm59, %v2101, %v2109
  %v2135 = vsel %vm59, %v2102, %v2111
  %v2136 = vsel %vm63, %v2133, %v2116
  %v2137 = vsel %vm63, %v2134, %v2118
  %v2138 = vsel %vm63, %v2135, %v2120
  %v2139 = vsel %vm67, %v2136, %v2125
  %v2140 = vsel %vm67, %v2137, %v2127
  %v2141 = vsel %vm67, %v2138, %v2129
  %v2142 = vlaneseq
  %v2143 = vshrl.u32 %v2142, 7
  %v2144 = vsub.s32 5, %v2143
  %v2145 = vrot.slane %v1110, %v2144
  %v2146 = vmul.f32 %v2145, %v2139
  %v2147 = vmul.f32 %v2145, %v2140
  %v2148 = vadd.f32 %v2097, %v2146
  %v2149 = vadd.f32 %v2098, %v2147
  %v2150 = vlaneseq
  %v2151 = vshrl.u32 %v2150, 7
  %v2152 = vsub.s32 0, %v2151
  %v2153 = vrot.slane %v1111, %v2152
  %v2154 = vmul.f32 %v2153, %v2139
  %v2155 = vmul.f32 %v2153, %v2140
  %v2156 = vmul.f32 %v2153, %v2141
  %v2160 = vrot.slane %v2154, 2
  %v2161 = vrot.slane %v2155, 2
  %v2162 = vsel %vm89, %v2160, %v2161
  %v2163 = vrot.slane %v2156, 2
  %v2164 = vsel %vm89, %v2161, %v2163
  %v2167 = vadd.f32 %v2148, %v2162
  %v2168 = vadd.f32 %v2149, %v2164
  %v2169 = vlaneseq
  %v2170 = vshrl.u32 %v2169, 7
  %v2171 = vsub.s32 3, %v2170
  %v2172 = vrot.slane %v1111, %v2171
  %v2173 = vmul.f32 %v2172, %v2139
  %v2174 = vmul.f32 %v2172, %v2140
  %v2175 = vmul.f32 %v2172, %v2141
  %v2179 = vrot.slane %v2173, 4
  %v2180 = vrot.slane %v2174, 4
  %v2181 = vsel %vm109, %v2179, %v2180
  %v2182 = vrot.slane %v2175, 4
  %v2183 = vsel %vm109, %v2180, %v2182
  %v2186 = vadd.f32 %v2167, %v2181
  %v2187 = vadd.f32 %v2168, %v2183
  %vm2188 = vcmp.gt.f32.partialorder %v2186, 0.0
  %vm2189 = vcmp.gt.f32.partialorder %v2187, 0.0
  %v2190 = vmul.f32 %v2186, 0.294378
  %v2191 = vmul.f32 %v2187, 0.294378
  %v2192 = vsel %vm2188, %v2186, %v2190
  %v2193 = vsel %vm2189, %v2187, %v2191
  %s2194 = scalar_lea.vmem %s3, 16
  %2195 = vst [vmem:[%s2194] sm:$0xff] %v2192
  %2196 = vst [vmem:[%s2194 + $0x8] sm:$0xff] %v2193
  // Predicated region
  $region14: #{conv_transpose_leaky.1} parent=0 // pred_check
    _
  $region15: #{conv_transpose_leaky.1} parent=0 // pred_check_branch
    %2198 = sbr.rel (0) target = $region17
  $region16: #{conv_transpose_leaky.1} parent=0 // pred_region
    _
  $region17: #{conv_transpose_leaky.1} parent=0 // pred_fallthru
    _
  // Predicated region
  $region18: #{conv_transpose_leaky.1} parent=0 // pred_check
    _
  $region19: #{conv_transpose_leaky.1} parent=0 // pred_check_branch
    %2200 = sbr.rel (0) target = $region21
  $region20: #{conv_transpose_leaky.1} parent=0 // pred_region
    _
  $region21: #{conv_transpose_leaky.1} parent=0 // pred_fallthru
    _

</llo_original>
